<compile_context>
chip_gen: v5e
topology: v5e:2x2
jax: 0.10.0
libtpu: 0.0.40
codegen_flags: <defaults>
</compile_context>

<pallas_src>
import functools

import jax
import jax.numpy as jnp
from jax.experimental import pallas as pl
from jax.experimental.pallas import tpu as pltpu

LANES = 128
GROUP_ROWS = 8                                # one f32 vreg worth of sublanes
GROUPS_PER_ITER = 16                          # manual unroll inside fori_loop
ROWS_PER_ITER = GROUP_ROWS * GROUPS_PER_ITER  # 128 rows / loop iteration
NUM_CORE_SPLITS = 2                           # "parallel" axis: both TCs on v7x


def _round_up(n, m):
    return (n + m - 1) // m * m


def _pemoq_kernel(x_ref, y_ref, out_ref, *, tile_rows, steps, valid_rows,
                  needs_mask):
    c = pl.program_id(0)   # core-split index (parallel)
    s = pl.program_id(1)   # per-core step   (arbitrary / reduction)

    # Per-core accumulator lives directly in the output block (same block
    # index across the s axis -> resident in VMEM, written back once).
    @pl.when(s == 0)
    def _init():
        out_ref[...] = jnp.zeros_like(out_ref)

    # Intended (unclamped) row offset of this block in the slab.  The input
    # index_map clamps the block index, so a duplicated/OOB trailing block of
    # the 2-way split re-reads the last valid block and is fully masked here.
    block_start = (c * steps + s) * tile_rows
    n_iters = tile_rows // ROWS_PER_ITER

    def fold(masked):
        if masked:
            rows_valid = valid_rows - block_start   # may be <= 0 (dup block)
            base_iota = jax.lax.broadcasted_iota(
                jnp.int32, (GROUP_ROWS, LANES), 0)  # hoisted out of the loop

        def body(it, carry):
            sx, sy, sxy, sxx, syy = carry
            for g in range(GROUPS_PER_ITER):        # static unroll
                r = it * ROWS_PER_ITER + g * GROUP_ROWS
                r = pl.multiple_of(r, GROUP_ROWS)
                # auditory model: clamp(x, min=0) == ReLU, cast in vregs.
                xs = jnp.maximum(
                    x_ref[pl.ds(r, GROUP_ROWS), :].astype(jnp.float32), 0.0)
                ys = jnp.maximum(
                    y_ref[pl.ds(r, GROUP_ROWS), :].astype(jnp.float32), 0.0)
                if masked:
                    # Mask BEFORE any products: the tail of a partial block
                    # holds stale VMEM (possibly NaN/Inf).
                    keep = (base_iota + r) < rows_valid
                    xs = jnp.where(keep, xs, 0.0)
                    ys = jnp.where(keep, ys, 0.0)
                sx = sx + xs
                sy = sy + ys
                sxy = sxy + xs * ys
                sxx = sxx + xs * xs
                syy = syy + ys * ys
            return sx, sy, sxy, sxx, syy

        z = jnp.zeros((GROUP_ROWS, LANES), jnp.float32)
        sx, sy, sxy, sxx, syy = jax.lax.fori_loop(
            0, n_iters, body, (z, z, z, z, z))
        out_ref[0] += sx
        out_ref[1] += sy
        out_ref[2] += sxy
        out_ref[3] += sxx
        out_ref[4] += syy

    if not needs_mask:
        # Row count divides the grid exactly: no mask code emitted at all.
        fold(False)
    else:
        # Gate the mask: full blocks take the unmasked path, only the (rare)
        # partial / duplicated trailing block pays the iota+select cost.
        is_full = block_start + tile_rows <= valid_rows

        @pl.when(is_full)
        def _full():
            fold(False)

        @pl.when(jnp.logical_not(is_full))
        def _partial():
            fold(True)


def pemoq(predictions, targets, *, tile_rows=8192):
    if predictions.shape != targets.shape:
        raise ValueError("Input tensors must have the same shape")

    n_elems = predictions.size

    def _to_slab(a):
        flat = jnp.ravel(a)  # keep original dtype; cast happens in-kernel
        pad = (-flat.size) % LANES
        if pad:
            # Rare fallback (<128 elems): tiny tail pad so the slab is
            # lane-dense.  Zeros contribute nothing to the sums.
            flat = jnp.pad(flat, (0, pad))
        return flat.reshape(-1, LANES)

    x2d = _to_slab(predictions)
    y2d = _to_slab(targets)
    rows = x2d.shape[0]

    # Tile rows: multiple of the in-kernel unroll granularity, never (much)
    # bigger than the data itself.
    tile_rows = max(ROWS_PER_ITER,
                    min(_round_up(tile_rows, ROWS_PER_ITER),
                        _round_up(rows, ROWS_PER_ITER)))
    rows_blocks = pl.cdiv(rows, tile_rows)
    steps = pl.cdiv(rows_blocks, NUM_CORE_SPLITS)
    needs_mask = (NUM_CORE_SPLITS * steps * tile_rows) != rows
    last_block = rows_blocks - 1

    def in_index_map(c, s):
        # Clamp so a duplicated/OOB trailing block of the core split re-reads
        # the last valid block (the kernel masks its contribution to zero).
        return (jnp.minimum(c * steps + s, last_block), 0)

    kernel = functools.partial(
        _pemoq_kernel,
        tile_rows=tile_rows,
        steps=steps,
        valid_rows=rows,
        needs_mask=needs_mask,
    )

    # Double-buffered input blocks + small output/accumulator + headroom.
    block_bytes_total = tile_rows * LANES * (
        x2d.dtype.itemsize + y2d.dtype.itemsize)
    vmem_limit = int(min(max(2 * block_bytes_total + (8 << 20), 32 << 20),
                         48 << 20))

    bytes_accessed = int(x2d.size * x2d.dtype.itemsize
                         + y2d.size * y2d.dtype.itemsize
                         + NUM_CORE_SPLITS * 5 * GROUP_ROWS * LANES * 4)

    partials = pl.pallas_call(
        kernel,
        out_shape=jax.ShapeDtypeStruct(
            (NUM_CORE_SPLITS * 5, GROUP_ROWS, LANES), jnp.float32),
        grid_spec=pltpu.PrefetchScalarGridSpec(
            num_scalar_prefetch=0,
            grid=(NUM_CORE_SPLITS, steps),
            in_specs=[
                pl.BlockSpec((tile_rows, LANES), in_index_map),
                pl.BlockSpec((tile_rows, LANES), in_index_map),
            ],
            out_specs=pl.BlockSpec((5, GROUP_ROWS, LANES),
                                   lambda c, s: (c, 0, 0)),
        ),
        compiler_params=pltpu.CompilerParams(
            dimension_semantics=("parallel", "arbitrary"),
            vmem_limit_bytes=vmem_limit,
        ),
        cost_estimate=pl.CostEstimate(
            flops=10 * n_elems,
            transcendentals=0,
            bytes_accessed=bytes_accessed,
        ),
    )(x2d, y2d)

    # Trivial cross-core combine + xcorr formula (a few hundred bytes of work).
    sums = jnp.sum(
        partials.reshape(NUM_CORE_SPLITS, 5, GROUP_ROWS, LANES),
        axis=(0, 2, 3))
    sx, sy, sxy, sxx, syy = (sums[i] for i in range(5))
    n = jnp.float32(n_elems)
    # sum((x - mean(x)) * (y - mean(y))) = sum(xy) - sum(x)*sum(y)/N, etc.
    numerator = sxy - sx * sy / n
    # clamp: one-pass variance can go slightly negative from cancellation
    dx = jnp.maximum(sxx - sx * sx / n, 0.0)
    dy = jnp.maximum(syy - sy * sy / n, 0.0)
    denominator = jnp.sqrt(dx * dy)
    return numerator / (denominator + jnp.float32(1e-8))


def pemoq_ref(predictions, targets):
    x = jnp.maximum(predictions.astype(jnp.float32), 0.0)
    y = jnp.maximum(targets.astype(jnp.float32), 0.0)
    x = x - jnp.mean(x)
    y = y - jnp.mean(y)
    num = jnp.sum(x * y)
    den = jnp.sqrt(jnp.sum(x * x) * jnp.sum(y * y))
    return num / (den + 1e-8)


if __name__ == "__main__":
    key = jax.random.PRNGKey(0)
    k1, k2, k3, k4 = jax.random.split(key, 4)

    # NCHW-shaped inputs, as the PyTorch module would typically receive.
    predictions = jax.random.normal(k1, (2, 4, 16, 16), dtype=jnp.float32)
    targets = jax.random.normal(k2, (2, 4, 16, 16), dtype=jnp.float32)

    psm = pemoq(predictions, targets)
    psm = jax.block_until_ready(psm)
    expected = pemoq_ref(predictions, targets)
    assert jnp.allclose(psm, expected, atol=1e-5, rtol=1e-5), (psm, expected)

    # Ragged shape: exercises the tail pad + gated partial-block mask path.
    p2 = jax.random.normal(k3, (3, 5, 7, 11), dtype=jnp.float32)
    t2 = jax.random.normal(k4, (3, 5, 7, 11), dtype=jnp.float32)
    psm2 = jax.block_until_ready(pemoq(p2, t2))
    expected2 = pemoq_ref(p2, t2)
    assert jnp.allclose(psm2, expected2, atol=1e-5, rtol=1e-5), (psm2, expected2)

    print("KERNEL_OK")
</pallas_src>

<mosaic_0001>
module attributes {stable_mosaic.version = 11 : i64} {
  func.func @_pemoq_kernel(%arg0: i32, %arg1: i32, %arg2: memref<128x128xf32, #tpu.memory_space<vmem>>, %arg3: memref<128x128xf32, #tpu.memory_space<vmem>>, %arg4: memref<5x8x128xf32, #tpu.memory_space<vmem>>) attributes {dimension_semantics = [#tpu.dimension_semantics<parallel>, #tpu.dimension_semantics<arbitrary>], iteration_bounds = array<i64: 2, 1>, scalar_prefetch = 0 : i64, scratch_operands = 0 : i64, tpu.core_type = #tpu.core_type<tc>, window_params = [{transform_indices = @transform_0, window_bounds = array<i64: 128, 128>}, {transform_indices = @transform_1, window_bounds = array<i64: 128, 128>}, {transform_indices = @transform_2, window_bounds = array<i64: 5, 8, 128>}]} {
    %c0_i32 = arith.constant 0 : i32
    %0 = arith.cmpi eq, %arg1, %c0_i32 : i32
    %1 = arith.extui %0 : i1 to i32
    %c0_i32_0 = arith.constant 0 : i32
    %2 = arith.cmpi ne, %1, %c0_i32_0 : i32
    scf.if %2 {
      %cst = arith.constant 0.000000e+00 : f32
      %13 = vector.broadcast %cst : f32 to vector<5x8x128xf32>
      %c0 = arith.constant 0 : index
      %c0_4 = arith.constant 0 : index
      %c0_5 = arith.constant 0 : index
      %14 = vector.load %arg4[%c0, %c0_4, %c0_5] : memref<5x8x128xf32, #tpu.memory_space<vmem>>, vector<5x8x128xf32>
      tpu.vector_store %arg4[%c0, %c0_4, %c0_5], %13 {strides = array<i32>} : memref<5x8x128xf32, #tpu.memory_space<vmem>>, vector<5x8x128xf32>,
    } else {
    }
    %c1_i32 = arith.constant 1 : i32
    %3 = arith.muli %arg0, %c1_i32 : i32
    %4 = arith.addi %3, %arg1 : i32
    %c128_i32 = arith.constant 128 : i32
    %5 = arith.muli %4, %c128_i32 : i32
    %c128_i32_1 = arith.constant 128 : i32
    %6 = arith.addi %5, %c128_i32_1 : i32
    %c16_i32 = arith.constant 16 : i32
    %7 = arith.cmpi sle, %6, %c16_i32 : i32
    %8 = arith.extui %7 : i1 to i32
    %c0_i32_2 = arith.constant 0 : i32
    %9 = arith.cmpi ne, %8, %c0_i32_2 : i32
    scf.if %9 {
      %cst = arith.constant 0.000000e+00 : f32
      %13 = vector.broadcast %cst : f32 to vector<8x128xf32>
      %c0_i32_4 = arith.constant 0 : i32
      %c128_i32_5 = arith.constant 128 : i32
      %14 = arith.muli %c0_i32_4, %c128_i32_5 : i32
      %c0_i32_6 = arith.constant 0 : i32
      %15 = arith.addi %14, %c0_i32_6 : i32
      %16 = tpu.assume_multiple %15, 8 : i32
      %17 = arith.index_cast %16 : i32 to index
      %c0 = arith.constant 0 : index
      %18 = vector.load %arg2[%17, %c0] : memref<128x128xf32, #tpu.memory_space<vmem>>, vector<8x128xf32>
      %cst_7 = arith.constant 0.000000e+00 : f32
      %19 = vector.broadcast %cst_7 : f32 to vector<8x128xf32>
      %20 = arith.maximumf %18, %19 : vector<8x128xf32>
      %21 = arith.index_cast %16 : i32 to index
      %c0_8 = arith.constant 0 : index
      %22 = vector.load %arg3[%21, %c0_8] : memref<128x128xf32, #tpu.memory_space<vmem>>, vector<8x128xf32>
      %cst_9 = arith.constant 0.000000e+00 : f32
      %23 = vector.broadcast %cst_9 : f32 to vector<8x128xf32>
      %24 = arith.maximumf %22, %23 : vector<8x128xf32>
      %25 = arith.addf %13, %20 : vector<8x128xf32>
      %26 = arith.addf %13, %24 : vector<8x128xf32>
      %27 = arith.mulf %20, %24 : vector<8x128xf32>
      %28 = arith.addf %13, %27 : vector<8x128xf32>
      %29 = arith.mulf %20, %20 : vector<8x128xf32>
      %30 = arith.addf %13, %29 : vector<8x128xf32>
      %31 = arith.mulf %24, %24 : vector<8x128xf32>
      %32 = arith.addf %13, %31 : vector<8x128xf32>
      %c128_i32_10 = arith.constant 128 : i32
      %33 = arith.muli %c0_i32_4, %c128_i32_10 : i32
      %c8_i32 = arith.constant 8 : i32
      %34 = arith.addi %33, %c8_i32 : i32
      %35 = tpu.assume_multiple %34, 8 : i32
      %36 = arith.index_cast %35 : i32 to index
      %c0_11 = arith.constant 0 : index
      %37 = vector.load %arg2[%36, %c0_11] : memref<128x128xf32, #tpu.memory_space<vmem>>, vector<8x128xf32>
      %cst_12 = arith.constant 0.000000e+00 : f32
      %38 = vector.broadcast %cst_12 : f32 to vector<8x128xf32>
      %39 = arith.maximumf %37, %38 : vector<8x128xf32>
      %40 = arith.index_cast %35 : i32 to index
      %c0_13 = arith.constant 0 : index
      %41 = vector.load %arg3[%40, %c0_13] : memref<128x128xf32, #tpu.memory_space<vmem>>, vector<8x128xf32>
      %cst_14 = arith.constant 0.000000e+00 : f32
      %42 = vector.broadcast %cst_14 : f32 to vector<8x128xf32>
      %43 = arith.maximumf %41, %42 : vector<8x128xf32>
      %44 = arith.addf %25, %39 : vector<8x128xf32>
      %45 = arith.addf %26, %43 : vector<8x128xf32>
      %46 = arith.mulf %39, %43 : vector<8x128xf32>
      %47 = arith.addf %28, %46 : vector<8x128xf32>
      %48 = arith.mulf %39, %39 : vector<8x128xf32>
      %49 = arith.addf %30, %48 : vector<8x128xf32>
      %50 = arith.mulf %43, %43 : vector<8x128xf32>
      %51 = arith.addf %32, %50 : vector<8x128xf32>
      %c128_i32_15 = arith.constant 128 : i32
      %52 = arith.muli %c0_i32_4, %c128_i32_15 : i32
      %c16_i32_16 = arith.constant 16 : i32
      %53 = arith.addi %52, %c16_i32_16 : i32
      %54 = tpu.assume_multiple %53, 8 : i32
      %55 = arith.index_cast %54 : i32 to index
      %c0_17 = arith.constant 0 : index
      %56 = vector.load %arg2[%55, %c0_17] : memref<128x128xf32, #tpu.memory_space<vmem>>, vector<8x128xf32>
      %cst_18 = arith.constant 0.000000e+00 : f32
      %57 = vector.broadcast %cst_18 : f32 to vector<8x128xf32>
      %58 = arith.maximumf %56, %57 : vector<8x128xf32>
      %59 = arith.index_cast %54 : i32 to index
      %c0_19 = arith.constant 0 : index
      %60 = vector.load %arg3[%59, %c0_19] : memref<128x128xf32, #tpu.memory_space<vmem>>, vector<8x128xf32>
      %cst_20 = arith.constant 0.000000e+00 : f32
      %61 = vector.broadcast %cst_20 : f32 to vector<8x128xf32>
      %62 = arith.maximumf %60, %61 : vector<8x128xf32>
      %63 = arith.addf %44, %58 : vector<8x128xf32>
      %64 = arith.addf %45, %62 : vector<8x128xf32>
      %65 = arith.mulf %58, %62 : vector<8x128xf32>
      %66 = arith.addf %47, %65 : vector<8x128xf32>
      %67 = arith.mulf %58, %58 : vector<8x128xf32>
      %68 = arith.addf %49, %67 : vector<8x128xf32>
      %69 = arith.mulf %62, %62 : vector<8x128xf32>
      %70 = arith.addf %51, %69 : vector<8x128xf32>
      %c128_i32_21 = arith.constant 128 : i32
      %71 = arith.muli %c0_i32_4, %c128_i32_21 : i32
      %c24_i32 = arith.constant 24 : i32
      %72 = arith.addi %71, %c24_i32 : i32
      %73 = tpu.assume_multiple %72, 8 : i32
      %74 = arith.index_cast %73 : i32 to index
      %c0_22 = arith.constant 0 : index
      %75 = vector.load %arg2[%74, %c0_22] : memref<128x128xf32, #tpu.memory_space<vmem>>, vector<8x128xf32>
      %cst_23 = arith.constant 0.000000e+00 : f32
      %76 = vector.broadcast %cst_23 : f32 to vector<8x128xf32>
      %77 = arith.maximumf %75, %76 : vector<8x128xf32>
      %78 = arith.index_cast %73 : i32 to index
      %c0_24 = arith.constant 0 : index
      %79 = vector.load %arg3[%78, %c0_24] : memref<128x128xf32, #tpu.memory_space<vmem>>, vector<8x128xf32>
      %cst_25 = arith.constant 0.000000e+00 : f32
      %80 = vector.broadcast %cst_25 : f32 to vector<8x128xf32>
      %81 = arith.maximumf %79, %80 : vector<8x128xf32>
      %82 = arith.addf %63, %77 : vector<8x128xf32>
      %83 = arith.addf %64, %81 : vector<8x128xf32>
      %84 = arith.mulf %77, %81 : vector<8x128xf32>
      %85 = arith.addf %66, %84 : vector<8x128xf32>
      %86 = arith.mulf %77, %77 : vector<8x128xf32>
      %87 = arith.addf %68, %86 : vector<8x128xf32>
      %88 = arith.mulf %81, %81 : vector<8x128xf32>
      %89 = arith.addf %70, %88 : vector<8x128xf32>
      %c128_i32_26 = arith.constant 128 : i32
      %90 = arith.muli %c0_i32_4, %c128_i32_26 : i32
      %c32_i32 = arith.constant 32 : i32
      %91 = arith.addi %90, %c32_i32 : i32
      %92 = tpu.assume_multiple %91, 8 : i32
      %93 = arith.index_cast %92 : i32 to index
      %c0_27 = arith.constant 0 : index
      %94 = vector.load %arg2[%93, %c0_27] : memref<128x128xf32, #tpu.memory_space<vmem>>, vector<8x128xf32>
      %cst_28 = arith.constant 0.000000e+00 : f32
      %95 = vector.broadcast %cst_28 : f32 to vector<8x128xf32>
      %96 = arith.maximumf %94, %95 : vector<8x128xf32>
      %97 = arith.index_cast %92 : i32 to index
      %c0_29 = arith.constant 0 : index
      %98 = vector.load %arg3[%97, %c0_29] : memref<128x128xf32, #tpu.memory_space<vmem>>, vector<8x128xf32>
      %cst_30 = arith.constant 0.000000e+00 : f32
      %99 = vector.broadcast %cst_30 : f32 to vector<8x128xf32>
      %100 = arith.maximumf %98, %99 : vector<8x128xf32>
      %101 = arith.addf %82, %96 : vector<8x128xf32>
      %102 = arith.addf %83, %100 : vector<8x128xf32>
      %103 = arith.mulf %96, %100 : vector<8x128xf32>
      %104 = arith.addf %85, %103 : vector<8x128xf32>
      %105 = arith.mulf %96, %96 : vector<8x128xf32>
      %106 = arith.addf %87, %105 : vector<8x128xf32>
      %107 = arith.mulf %100, %100 : vector<8x128xf32>
      %108 = arith.addf %89, %107 : vector<8x128xf32>
      %c128_i32_31 = arith.constant 128 : i32
      %109 = arith.muli %c0_i32_4, %c128_i32_31 : i32
      %c40_i32 = arith.constant 40 : i32
      %110 = arith.addi %109, %c40_i32 : i32
      %111 = tpu.assume_multiple %110, 8 : i32
      %112 = arith.index_cast %111 : i32 to index
      %c0_32 = arith.constant 0 : index
      %113 = vector.load %arg2[%112, %c0_32] : memref<128x128xf32, #tpu.memory_space<vmem>>, vector<8x128xf32>
      %cst_33 = arith.constant 0.000000e+00 : f32
      %114 = vector.broadcast %cst_33 : f32 to vector<8x128xf32>
      %115 = arith.maximumf %113, %114 : vector<8x128xf32>
      %116 = arith.index_cast %111 : i32 to index
      %c0_34 = arith.constant 0 : index
      %117 = vector.load %arg3[%116, %c0_34] : memref<128x128xf32, #tpu.memory_space<vmem>>, vector<8x128xf32>
      %cst_35 = arith.constant 0.000000e+00 : f32
      %118 = vector.broadcast %cst_35 : f32 to vector<8x128xf32>
      %119 = arith.maximumf %117, %118 : vector<8x128xf32>
      %120 = arith.addf %101, %115 : vector<8x128xf32>
      %121 = arith.addf %102, %119 : vector<8x128xf32>
      %122 = arith.mulf %115, %119 : vector<8x128xf32>
      %123 = arith.addf %104, %122 : vector<8x128xf32>
      %124 = arith.mulf %115, %115 : vector<8x128xf32>
      %125 = arith.addf %106, %124 : vector<8x128xf32>
      %126 = arith.mulf %119, %119 : vector<8x128xf32>
      %127 = arith.addf %108, %126 : vector<8x128xf32>
      %c128_i32_36 = arith.constant 128 : i32
      %128 = arith.muli %c0_i32_4, %c128_i32_36 : i32
      %c48_i32 = arith.constant 48 : i32
      %129 = arith.addi %128, %c48_i32 : i32
      %130 = tpu.assume_multiple %129, 8 : i32
      %131 = arith.index_cast %130 : i32 to index
      %c0_37 = arith.constant 0 : index
      %132 = vector.load %arg2[%131, %c0_37] : memref<128x128xf32, #tpu.memory_space<vmem>>, vector<8x128xf32>
      %cst_38 = arith.constant 0.000000e+00 : f32
      %133 = vector.broadcast %cst_38 : f32 to vector<8x128xf32>
      %134 = arith.maximumf %132, %133 : vector<8x128xf32>
      %135 = arith.index_cast %130 : i32 to index
      %c0_39 = arith.constant 0 : index
      %136 = vector.load %arg3[%135, %c0_39] : memref<128x128xf32, #tpu.memory_space<vmem>>, vector<8x128xf32>
      %cst_40 = arith.constant 0.000000e+00 : f32
      %137 = vector.broadcast %cst_40 : f32 to vector<8x128xf32>
      %138 = arith.maximumf %136, %137 : vector<8x128xf32>
      %139 = arith.addf %120, %134 : vector<8x128xf32>
      %140 = arith.addf %121, %138 : vector<8x128xf32>
      %141 = arith.mulf %134, %138 : vector<8x128xf32>
      %142 = arith.addf %123, %141 : vector<8x128xf32>
      %143 = arith.mulf %134, %134 : vector<8x128xf32>
      %144 = arith.addf %125, %143 : vector<8x128xf32>
      %145 = arith.mulf %138, %138 : vector<8x128xf32>
      %146 = arith.addf %127, %145 : vector<8x128xf32>
      %c128_i32_41 = arith.constant 128 : i32
      %147 = arith.muli %c0_i32_4, %c128_i32_41 : i32
      %c56_i32 = arith.constant 56 : i32
      %148 = arith.addi %147, %c56_i32 : i32
      %149 = tpu.assume_multiple %148, 8 : i32
      %150 = arith.index_cast %149 : i32 to index
      %c0_42 = arith.constant 0 : index
      %151 = vector.load %arg2[%150, %c0_42] : memref<128x128xf32, #tpu.memory_space<vmem>>, vector<8x128xf32>
      %cst_43 = arith.constant 0.000000e+00 : f32
      %152 = vector.broadcast %cst_43 : f32 to vector<8x128xf32>
      %153 = arith.maximumf %151, %152 : vector<8x128xf32>
      %154 = arith.index_cast %149 : i32 to index
      %c0_44 = arith.constant 0 : index
      %155 = vector.load %arg3[%154, %c0_44] : memref<128x128xf32, #tpu.memory_space<vmem>>, vector<8x128xf32>
      %cst_45 = arith.constant 0.000000e+00 : f32
      %156 = vector.broadcast %cst_45 : f32 to vector<8x128xf32>
      %157 = arith.maximumf %155, %156 : vector<8x128xf32>
      %158 = arith.addf %139, %153 : vector<8x128xf32>
      %159 = arith.addf %140, %157 : vector<8x128xf32>
      %160 = arith.mulf %153, %157 : vector<8x128xf32>
      %161 = arith.addf %142, %160 : vector<8x128xf32>
      %162 = arith.mulf %153, %153 : vector<8x128xf32>
      %163 = arith.addf %144, %162 : vector<8x128xf32>
      %164 = arith.mulf %157, %157 : vector<8x128xf32>
      %165 = arith.addf %146, %164 : vector<8x128xf32>
      %c128_i32_46 = arith.constant 128 : i32
      %166 = arith.muli %c0_i32_4, %c128_i32_46 : i32
      %c64_i32 = arith.constant 64 : i32
      %167 = arith.addi %166, %c64_i32 : i32
      %168 = tpu.assume_multiple %167, 8 : i32
      %169 = arith.index_cast %168 : i32 to index
      %c0_47 = arith.constant 0 : index
      %170 = vector.load %arg2[%169, %c0_47] : memref<128x128xf32, #tpu.memory_space<vmem>>, vector<8x128xf32>
      %cst_48 = arith.constant 0.000000e+00 : f32
      %171 = vector.broadcast %cst_48 : f32 to vector<8x128xf32>
      %172 = arith.maximumf %170, %171 : vector<8x128xf32>
      %173 = arith.index_cast %168 : i32 to index
      %c0_49 = arith.constant 0 : index
      %174 = vector.load %arg3[%173, %c0_49] : memref<128x128xf32, #tpu.memory_space<vmem>>, vector<8x128xf32>
      %cst_50 = arith.constant 0.000000e+00 : f32
      %175 = vector.broadcast %cst_50 : f32 to vector<8x128xf32>
      %176 = arith.maximumf %174, %175 : vector<8x128xf32>
      %177 = arith.addf %158, %172 : vector<8x128xf32>
      %178 = arith.addf %159, %176 : vector<8x128xf32>
      %179 = arith.mulf %172, %176 : vector<8x128xf32>
      %180 = arith.addf %161, %179 : vector<8x128xf32>
      %181 = arith.mulf %172, %172 : vector<8x128xf32>
      %182 = arith.addf %163, %181 : vector<8x128xf32>
      %183 = arith.mulf %176, %176 : vector<8x128xf32>
      %184 = arith.addf %165, %183 : vector<8x128xf32>
      %c128_i32_51 = arith.constant 128 : i32
      %185 = arith.muli %c0_i32_4, %c128_i32_51 : i32
      %c72_i32 = arith.constant 72 : i32
      %186 = arith.addi %185, %c72_i32 : i32
      %187 = tpu.assume_multiple %186, 8 : i32
      %188 = arith.index_cast %187 : i32 to index
      %c0_52 = arith.constant 0 : index
      %189 = vector.load %arg2[%188, %c0_52] : memref<128x128xf32, #tpu.memory_space<vmem>>, vector<8x128xf32>
      %cst_53 = arith.constant 0.000000e+00 : f32
      %190 = vector.broadcast %cst_53 : f32 to vector<8x128xf32>
      %191 = arith.maximumf %189, %190 : vector<8x128xf32>
      %192 = arith.index_cast %187 : i32 to index
      %c0_54 = arith.constant 0 : index
      %193 = vector.load %arg3[%192, %c0_54] : memref<128x128xf32, #tpu.memory_space<vmem>>, vector<8x128xf32>
      %cst_55 = arith.constant 0.000000e+00 : f32
      %194 = vector.broadcast %cst_55 : f32 to vector<8x128xf32>
      %195 = arith.maximumf %193, %194 : vector<8x128xf32>
      %196 = arith.addf %177, %191 : vector<8x128xf32>
      %197 = arith.addf %178, %195 : vector<8x128xf32>
      %198 = arith.mulf %191, %195 : vector<8x128xf32>
      %199 = arith.addf %180, %198 : vector<8x128xf32>
      %200 = arith.mulf %191, %191 : vector<8x128xf32>
      %201 = arith.addf %182, %200 : vector<8x128xf32>
      %202 = arith.mulf %195, %195 : vector<8x128xf32>
      %203 = arith.addf %184, %202 : vector<8x128xf32>
      %c128_i32_56 = arith.constant 128 : i32
      %204 = arith.muli %c0_i32_4, %c128_i32_56 : i32
      %c80_i32 = arith.constant 80 : i32
      %205 = arith.addi %204, %c80_i32 : i32
      %206 = tpu.assume_multiple %205, 8 : i32
      %207 = arith.index_cast %206 : i32 to index
      %c0_57 = arith.constant 0 : index
      %208 = vector.load %arg2[%207, %c0_57] : memref<128x128xf32, #tpu.memory_space<vmem>>, vector<8x128xf32>
      %cst_58 = arith.constant 0.000000e+00 : f32
      %209 = vector.broadcast %cst_58 : f32 to vector<8x128xf32>
      %210 = arith.maximumf %208, %209 : vector<8x128xf32>
      %211 = arith.index_cast %206 : i32 to index
      %c0_59 = arith.constant 0 : index
      %212 = vector.load %arg3[%211, %c0_59] : memref<128x128xf32, #tpu.memory_space<vmem>>, vector<8x128xf32>
      %cst_60 = arith.constant 0.000000e+00 : f32
      %213 = vector.broadcast %cst_60 : f32 to vector<8x128xf32>
      %214 = arith.maximumf %212, %213 : vector<8x128xf32>
      %215 = arith.addf %196, %210 : vector<8x128xf32>
      %216 = arith.addf %197, %214 : vector<8x128xf32>
      %217 = arith.mulf %210, %214 : vector<8x128xf32>
      %218 = arith.addf %199, %217 : vector<8x128xf32>
      %219 = arith.mulf %210, %210 : vector<8x128xf32>
      %220 = arith.addf %201, %219 : vector<8x128xf32>
      %221 = arith.mulf %214, %214 : vector<8x128xf32>
      %222 = arith.addf %203, %221 : vector<8x128xf32>
      %c128_i32_61 = arith.constant 128 : i32
      %223 = arith.muli %c0_i32_4, %c128_i32_61 : i32
      %c88_i32 = arith.constant 88 : i32
      %224 = arith.addi %223, %c88_i32 : i32
      %225 = tpu.assume_multiple %224, 8 : i32
      %226 = arith.index_cast %225 : i32 to index
      %c0_62 = arith.constant 0 : index
      %227 = vector.load %arg2[%226, %c0_62] : memref<128x128xf32, #tpu.memory_space<vmem>>, vector<8x128xf32>
      %cst_63 = arith.constant 0.000000e+00 : f32
      %228 = vector.broadcast %cst_63 : f32 to vector<8x128xf32>
      %229 = arith.maximumf %227, %228 : vector<8x128xf32>
      %230 = arith.index_cast %225 : i32 to index
      %c0_64 = arith.constant 0 : index
      %231 = vector.load %arg3[%230, %c0_64] : memref<128x128xf32, #tpu.memory_space<vmem>>, vector<8x128xf32>
      %cst_65 = arith.constant 0.000000e+00 : f32
      %232 = vector.broadcast %cst_65 : f32 to vector<8x128xf32>
      %233 = arith.maximumf %231, %232 : vector<8x128xf32>
      %234 = arith.addf %215, %229 : vector<8x128xf32>
      %235 = arith.addf %216, %233 : vector<8x128xf32>
      %236 = arith.mulf %229, %233 : vector<8x128xf32>
      %237 = arith.addf %218, %236 : vector<8x128xf32>
      %238 = arith.mulf %229, %229 : vector<8x128xf32>
      %239 = arith.addf %220, %238 : vector<8x128xf32>
      %240 = arith.mulf %233, %233 : vector<8x128xf32>
      %241 = arith.addf %222, %240 : vector<8x128xf32>
      %c128_i32_66 = arith.constant 128 : i32
      %242 = arith.muli %c0_i32_4, %c128_i32_66 : i32
      %c96_i32 = arith.constant 96 : i32
      %243 = arith.addi %242, %c96_i32 : i32
      %244 = tpu.assume_multiple %243, 8 : i32
      %245 = arith.index_cast %244 : i32 to index
      %c0_67 = arith.constant 0 : index
      %246 = vector.load %arg2[%245, %c0_67] : memref<128x128xf32, #tpu.memory_space<vmem>>, vector<8x128xf32>
      %cst_68 = arith.constant 0.000000e+00 : f32
      %247 = vector.broadcast %cst_68 : f32 to vector<8x128xf32>
      %248 = arith.maximumf %246, %247 : vector<8x128xf32>
      %249 = arith.index_cast %244 : i32 to index
      %c0_69 = arith.constant 0 : index
      %250 = vector.load %arg3[%249, %c0_69] : memref<128x128xf32, #tpu.memory_space<vmem>>, vector<8x128xf32>
      %cst_70 = arith.constant 0.000000e+00 : f32
      %251 = vector.broadcast %cst_70 : f32 to vector<8x128xf32>
      %252 = arith.maximumf %250, %251 : vector<8x128xf32>
      %253 = arith.addf %234, %248 : vector<8x128xf32>
      %254 = arith.addf %235, %252 : vector<8x128xf32>
      %255 = arith.mulf %248, %252 : vector<8x128xf32>
      %256 = arith.addf %237, %255 : vector<8x128xf32>
      %257 = arith.mulf %248, %248 : vector<8x128xf32>
      %258 = arith.addf %239, %257 : vector<8x128xf32>
      %259 = arith.mulf %252, %252 : vector<8x128xf32>
      %260 = arith.addf %241, %259 : vector<8x128xf32>
      %c128_i32_71 = arith.constant 128 : i32
      %261 = arith.muli %c0_i32_4, %c128_i32_71 : i32
      %c104_i32 = arith.constant 104 : i32
      %262 = arith.addi %261, %c104_i32 : i32
      %263 = tpu.assume_multiple %262, 8 : i32
      %264 = arith.index_cast %263 : i32 to index
      %c0_72 = arith.constant 0 : index
      %265 = vector.load %arg2[%264, %c0_72] : memref<128x128xf32, #tpu.memory_space<vmem>>, vector<8x128xf32>
      %cst_73 = arith.constant 0.000000e+00 : f32
      %266 = vector.broadcast %cst_73 : f32 to vector<8x128xf32>
      %267 = arith.maximumf %265, %266 : vector<8x128xf32>
      %268 = arith.index_cast %263 : i32 to index
      %c0_74 = arith.constant 0 : index
      %269 = vector.load %arg3[%268, %c0_74] : memref<128x128xf32, #tpu.memory_space<vmem>>, vector<8x128xf32>
      %cst_75 = arith.constant 0.000000e+00 : f32
      %270 = vector.broadcast %cst_75 : f32 to vector<8x128xf32>
      %271 = arith.maximumf %269, %270 : vector<8x128xf32>
      %272 = arith.addf %253, %267 : vector<8x128xf32>
      %273 = arith.addf %254, %271 : vector<8x128xf32>
      %274 = arith.mulf %267, %271 : vector<8x128xf32>
      %275 = arith.addf %256, %274 : vector<8x128xf32>
      %276 = arith.mulf %267, %267 : vector<8x128xf32>
      %277 = arith.addf %258, %276 : vector<8x128xf32>
      %278 = arith.mulf %271, %271 : vector<8x128xf32>
      %279 = arith.addf %260, %278 : vector<8x128xf32>
      %c128_i32_76 = arith.constant 128 : i32
      %280 = arith.muli %c0_i32_4, %c128_i32_76 : i32
      %c112_i32 = arith.constant 112 : i32
      %281 = arith.addi %280, %c112_i32 : i32
      %282 = tpu.assume_multiple %281, 8 : i32
      %283 = arith.index_cast %282 : i32 to index
      %c0_77 = arith.constant 0 : index
      %284 = vector.load %arg2[%283, %c0_77] : memref<128x128xf32, #tpu.memory_space<vmem>>, vector<8x128xf32>
      %cst_78 = arith.constant 0.000000e+00 : f32
      %285 = vector.broadcast %cst_78 : f32 to vector<8x128xf32>
      %286 = arith.maximumf %284, %285 : vector<8x128xf32>
      %287 = arith.index_cast %282 : i32 to index
      %c0_79 = arith.constant 0 : index
      %288 = vector.load %arg3[%287, %c0_79] : memref<128x128xf32, #tpu.memory_space<vmem>>, vector<8x128xf32>
      %cst_80 = arith.constant 0.000000e+00 : f32
      %289 = vector.broadcast %cst_80 : f32 to vector<8x128xf32>
      %290 = arith.maximumf %288, %289 : vector<8x128xf32>
      %291 = arith.addf %272, %286 : vector<8x128xf32>
      %292 = arith.addf %273, %290 : vector<8x128xf32>
      %293 = arith.mulf %286, %290 : vector<8x128xf32>
      %294 = arith.addf %275, %293 : vector<8x128xf32>
      %295 = arith.mulf %286, %286 : vector<8x128xf32>
      %296 = arith.addf %277, %295 : vector<8x128xf32>
      %297 = arith.mulf %290, %290 : vector<8x128xf32>
      %298 = arith.addf %279, %297 : vector<8x128xf32>
      %c128_i32_81 = arith.constant 128 : i32
      %299 = arith.muli %c0_i32_4, %c128_i32_81 : i32
      %c120_i32 = arith.constant 120 : i32
      %300 = arith.addi %299, %c120_i32 : i32
      %301 = tpu.assume_multiple %300, 8 : i32
      %302 = arith.index_cast %301 : i32 to index
      %c0_82 = arith.constant 0 : index
      %303 = vector.load %arg2[%302, %c0_82] : memref<128x128xf32, #tpu.memory_space<vmem>>, vector<8x128xf32>
      %cst_83 = arith.constant 0.000000e+00 : f32
      %304 = vector.broadcast %cst_83 : f32 to vector<8x128xf32>
      %305 = arith.maximumf %303, %304 : vector<8x128xf32>
      %306 = arith.index_cast %301 : i32 to index
      %c0_84 = arith.constant 0 : index
      %307 = vector.load %arg3[%306, %c0_84] : memref<128x128xf32, #tpu.memory_space<vmem>>, vector<8x128xf32>
      %cst_85 = arith.constant 0.000000e+00 : f32
      %308 = vector.broadcast %cst_85 : f32 to vector<8x128xf32>
      %309 = arith.maximumf %307, %308 : vector<8x128xf32>
      %310 = arith.addf %291, %305 : vector<8x128xf32>
      %311 = arith.addf %292, %309 : vector<8x128xf32>
      %312 = arith.mulf %305, %309 : vector<8x128xf32>
      %313 = arith.addf %294, %312 : vector<8x128xf32>
      %314 = arith.mulf %305, %305 : vector<8x128xf32>
      %315 = arith.addf %296, %314 : vector<8x128xf32>
      %316 = arith.mulf %309, %309 : vector<8x128xf32>
      %317 = arith.addf %298, %316 : vector<8x128xf32>
      %c1_i32_86 = arith.constant 1 : i32
      %c0_87 = arith.constant 0 : index
      %c0_88 = arith.constant 0 : index
      %c0_89 = arith.constant 0 : index
      %318 = vector.load %arg4[%c0_87, %c0_88, %c0_89] : memref<5x8x128xf32, #tpu.memory_space<vmem>>, vector<1x8x128xf32>
      %319 = vector.shape_cast %318 : vector<1x8x128xf32> to vector<8x128xf32>
      %320 = arith.addf %319, %310 : vector<8x128xf32>
      %c0_90 = arith.constant 0 : index
      %c0_91 = arith.constant 0 : index
      %c0_92 = arith.constant 0 : index
      %321 = vector.load %arg4[%c0_90, %c0_91, %c0_92] : memref<5x8x128xf32, #tpu.memory_space<vmem>>, vector<1x8x128xf32>
      %322 = vector.shape_cast %321 : vector<1x8x128xf32> to vector<8x128xf32>
      %323 = vector.shape_cast %320 : vector<8x128xf32> to vector<1x8x128xf32>
      tpu.vector_store %arg4[%c0_90, %c0_91, %c0_92], %323 {strides = array<i32>} : memref<5x8x128xf32, #tpu.memory_space<vmem>>, vector<1x8x128xf32>,
      %c1 = arith.constant 1 : index
      %c0_93 = arith.constant 0 : index
      %c0_94 = arith.constant 0 : index
      %324 = vector.load %arg4[%c1, %c0_93, %c0_94] : memref<5x8x128xf32, #tpu.memory_space<vmem>>, vector<1x8x128xf32>
      %325 = vector.shape_cast %324 : vector<1x8x128xf32> to vector<8x128xf32>
      %326 = arith.addf %325, %311 : vector<8x128xf32>
      %c1_95 = arith.constant 1 : index
      %c0_96 = arith.constant 0 : index
      %c0_97 = arith.constant 0 : index
      %327 = vector.load %arg4[%c1_95, %c0_96, %c0_97] : memref<5x8x128xf32, #tpu.memory_space<vmem>>, vector<1x8x128xf32>
      %328 = vector.shape_cast %327 : vector<1x8x128xf32> to vector<8x128xf32>
      %329 = vector.shape_cast %326 : vector<8x128xf32> to vector<1x8x128xf32>
      tpu.vector_store %arg4[%c1_95, %c0_96, %c0_97], %329 {strides = array<i32>} : memref<5x8x128xf32, #tpu.memory_space<vmem>>, vector<1x8x128xf32>,
      %c2 = arith.constant 2 : index
      %c0_98 = arith.constant 0 : index
      %c0_99 = arith.constant 0 : index
      %330 = vector.load %arg4[%c2, %c0_98, %c0_99] : memref<5x8x128xf32, #tpu.memory_space<vmem>>, vector<1x8x128xf32>
      %331 = vector.shape_cast %330 : vector<1x8x128xf32> to vector<8x128xf32>
      %332 = arith.addf %331, %313 : vector<8x128xf32>
      %c2_100 = arith.constant 2 : index
      %c0_101 = arith.constant 0 : index
      %c0_102 = arith.constant 0 : index
      %333 = vector.load %arg4[%c2_100, %c0_101, %c0_102] : memref<5x8x128xf32, #tpu.memory_space<vmem>>, vector<1x8x128xf32>
      %334 = vector.shape_cast %333 : vector<1x8x128xf32> to vector<8x128xf32>
      %335 = vector.shape_cast %332 : vector<8x128xf32> to vector<1x8x128xf32>
      tpu.vector_store %arg4[%c2_100, %c0_101, %c0_102], %335 {strides = array<i32>} : memref<5x8x128xf32, #tpu.memory_space<vmem>>, vector<1x8x128xf32>,
      %c3 = arith.constant 3 : index
      %c0_103 = arith.constant 0 : index
      %c0_104 = arith.constant 0 : index
      %336 = vector.load %arg4[%c3, %c0_103, %c0_104] : memref<5x8x128xf32, #tpu.memory_space<vmem>>, vector<1x8x128xf32>
      %337 = vector.shape_cast %336 : vector<1x8x128xf32> to vector<8x128xf32>
      %338 = arith.addf %337, %315 : vector<8x128xf32>
      %c3_105 = arith.constant 3 : index
      %c0_106 = arith.constant 0 : index
      %c0_107 = arith.constant 0 : index
      %339 = vector.load %arg4[%c3_105, %c0_106, %c0_107] : memref<5x8x128xf32, #tpu.memory_space<vmem>>, vector<1x8x128xf32>
      %340 = vector.shape_cast %339 : vector<1x8x128xf32> to vector<8x128xf32>
      %341 = vector.shape_cast %338 : vector<8x128xf32> to vector<1x8x128xf32>
      tpu.vector_store %arg4[%c3_105, %c0_106, %c0_107], %341 {strides = array<i32>} : memref<5x8x128xf32, #tpu.memory_space<vmem>>, vector<1x8x128xf32>,
      %c4 = arith.constant 4 : index
      %c0_108 = arith.constant 0 : index
      %c0_109 = arith.constant 0 : index
      %342 = vector.load %arg4[%c4, %c0_108, %c0_109] : memref<5x8x128xf32, #tpu.memory_space<vmem>>, vector<1x8x128xf32>
      %343 = vector.shape_cast %342 : vector<1x8x128xf32> to vector<8x128xf32>
      %344 = arith.addf %343, %317 : vector<8x128xf32>
      %c4_110 = arith.constant 4 : index
      %c0_111 = arith.constant 0 : index
      %c0_112 = arith.constant 0 : index
      %345 = vector.load %arg4[%c4_110, %c0_111, %c0_112] : memref<5x8x128xf32, #tpu.memory_space<vmem>>, vector<1x8x128xf32>
      %346 = vector.shape_cast %345 : vector<1x8x128xf32> to vector<8x128xf32>
      %347 = vector.shape_cast %344 : vector<8x128xf32> to vector<1x8x128xf32>
      tpu.vector_store %arg4[%c4_110, %c0_111, %c0_112], %347 {strides = array<i32>} : memref<5x8x128xf32, #tpu.memory_space<vmem>>, vector<1x8x128xf32>,
    } else {
    }
    %true = arith.constant true
    %10 = arith.xori %7, %true : i1
    %11 = arith.extui %10 : i1 to i32
    %c0_i32_3 = arith.constant 0 : i32
    %12 = arith.cmpi ne, %11, %c0_i32_3 : i32
    scf.if %12 {
      %c16_i32_4 = arith.constant 16 : i32
      %13 = arith.subi %c16_i32_4, %5 : i32
      %14 = tpu.iota {dimensions = array<i32: 0>} : vector<8x128xi32>
      %cst = arith.constant 0.000000e+00 : f32
      %15 = vector.broadcast %cst : f32 to vector<8x128xf32>
      %c0_i32_5 = arith.constant 0 : i32
      %c128_i32_6 = arith.constant 128 : i32
      %16 = arith.muli %c0_i32_5, %c128_i32_6 : i32
      %c0_i32_7 = arith.constant 0 : i32
      %17 = arith.addi %16, %c0_i32_7 : i32
      %18 = tpu.assume_multiple %17, 8 : i32
      %19 = arith.index_cast %18 : i32 to index
      %c0 = arith.constant 0 : index
      %20 = vector.load %arg2[%19, %c0] : memref<128x128xf32, #tpu.memory_space<vmem>>, vector<8x128xf32>
      %cst_8 = arith.constant 0.000000e+00 : f32
      %21 = vector.broadcast %cst_8 : f32 to vector<8x128xf32>
      %22 = arith.maximumf %20, %21 : vector<8x128xf32>
      %23 = arith.index_cast %18 : i32 to index
      %c0_9 = arith.constant 0 : index
      %24 = vector.load %arg3[%23, %c0_9] : memref<128x128xf32, #tpu.memory_space<vmem>>, vector<8x128xf32>
      %cst_10 = arith.constant 0.000000e+00 : f32
      %25 = vector.broadcast %cst_10 : f32 to vector<8x128xf32>
      %26 = arith.maximumf %24, %25 : vector<8x128xf32>
      %27 = vector.broadcast %18 : i32 to vector<8x128xi32>
      %28 = arith.addi %14, %27 : vector<8x128xi32>
      %29 = vector.broadcast %13 : i32 to vector<8x128xi32>
      %30 = arith.cmpi slt, %28, %29 : vector<8x128xi32>
      %cst_11 = arith.constant 0.000000e+00 : f32
      %31 = vector.broadcast %cst_11 : f32 to vector<8x128xf32>
      %32 = arith.select %30, %22, %31 : vector<8x128xi1>, vector<8x128xf32>
      %cst_12 = arith.constant 0.000000e+00 : f32
      %33 = vector.broadcast %cst_12 : f32 to vector<8x128xf32>
      %34 = arith.select %30, %26, %33 : vector<8x128xi1>, vector<8x128xf32>
      %35 = arith.addf %15, %32 : vector<8x128xf32>
      %36 = arith.addf %15, %34 : vector<8x128xf32>
      %37 = arith.mulf %32, %34 : vector<8x128xf32>
      %38 = arith.addf %15, %37 : vector<8x128xf32>
      %39 = arith.mulf %32, %32 : vector<8x128xf32>
      %40 = arith.addf %15, %39 : vector<8x128xf32>
      %41 = arith.mulf %34, %34 : vector<8x128xf32>
      %42 = arith.addf %15, %41 : vector<8x128xf32>
      %c128_i32_13 = arith.constant 128 : i32
      %43 = arith.muli %c0_i32_5, %c128_i32_13 : i32
      %c8_i32 = arith.constant 8 : i32
      %44 = arith.addi %43, %c8_i32 : i32
      %45 = tpu.assume_multiple %44, 8 : i32
      %46 = arith.index_cast %45 : i32 to index
      %c0_14 = arith.constant 0 : index
      %47 = vector.load %arg2[%46, %c0_14] : memref<128x128xf32, #tpu.memory_space<vmem>>, vector<8x128xf32>
      %cst_15 = arith.constant 0.000000e+00 : f32
      %48 = vector.broadcast %cst_15 : f32 to vector<8x128xf32>
      %49 = arith.maximumf %47, %48 : vector<8x128xf32>
      %50 = arith.index_cast %45 : i32 to index
      %c0_16 = arith.constant 0 : index
      %51 = vector.load %arg3[%50, %c0_16] : memref<128x128xf32, #tpu.memory_space<vmem>>, vector<8x128xf32>
      %cst_17 = arith.constant 0.000000e+00 : f32
      %52 = vector.broadcast %cst_17 : f32 to vector<8x128xf32>
      %53 = arith.maximumf %51, %52 : vector<8x128xf32>
      %54 = vector.broadcast %45 : i32 to vector<8x128xi32>
      %55 = arith.addi %14, %54 : vector<8x128xi32>
      %56 = vector.broadcast %13 : i32 to vector<8x128xi32>
      %57 = arith.cmpi slt, %55, %56 : vector<8x128xi32>
      %cst_18 = arith.constant 0.000000e+00 : f32
      %58 = vector.broadcast %cst_18 : f32 to vector<8x128xf32>
      %59 = arith.select %57, %49, %58 : vector<8x128xi1>, vector<8x128xf32>
      %cst_19 = arith.constant 0.000000e+00 : f32
      %60 = vector.broadcast %cst_19 : f32 to vector<8x128xf32>
      %61 = arith.select %57, %53, %60 : vector<8x128xi1>, vector<8x128xf32>
      %62 = arith.addf %35, %59 : vector<8x128xf32>
      %63 = arith.addf %36, %61 : vector<8x128xf32>
      %64 = arith.mulf %59, %61 : vector<8x128xf32>
      %65 = arith.addf %38, %64 : vector<8x128xf32>
      %66 = arith.mulf %59, %59 : vector<8x128xf32>
      %67 = arith.addf %40, %66 : vector<8x128xf32>
      %68 = arith.mulf %61, %61 : vector<8x128xf32>
      %69 = arith.addf %42, %68 : vector<8x128xf32>
      %c128_i32_20 = arith.constant 128 : i32
      %70 = arith.muli %c0_i32_5, %c128_i32_20 : i32
      %c16_i32_21 = arith.constant 16 : i32
      %71 = arith.addi %70, %c16_i32_21 : i32
      %72 = tpu.assume_multiple %71, 8 : i32
      %73 = arith.index_cast %72 : i32 to index
      %c0_22 = arith.constant 0 : index
      %74 = vector.load %arg2[%73, %c0_22] : memref<128x128xf32, #tpu.memory_space<vmem>>, vector<8x128xf32>
      %cst_23 = arith.constant 0.000000e+00 : f32
      %75 = vector.broadcast %cst_23 : f32 to vector<8x128xf32>
      %76 = arith.maximumf %74, %75 : vector<8x128xf32>
      %77 = arith.index_cast %72 : i32 to index
      %c0_24 = arith.constant 0 : index
      %78 = vector.load %arg3[%77, %c0_24] : memref<128x128xf32, #tpu.memory_space<vmem>>, vector<8x128xf32>
      %cst_25 = arith.constant 0.000000e+00 : f32
      %79 = vector.broadcast %cst_25 : f32 to vector<8x128xf32>
      %80 = arith.maximumf %78, %79 : vector<8x128xf32>
      %81 = vector.broadcast %72 : i32 to vector<8x128xi32>
      %82 = arith.addi %14, %81 : vector<8x128xi32>
      %83 = vector.broadcast %13 : i32 to vector<8x128xi32>
      %84 = arith.cmpi slt, %82, %83 : vector<8x128xi32>
      %cst_26 = arith.constant 0.000000e+00 : f32
      %85 = vector.broadcast %cst_26 : f32 to vector<8x128xf32>
      %86 = arith.select %84, %76, %85 : vector<8x128xi1>, vector<8x128xf32>
      %cst_27 = arith.constant 0.000000e+00 : f32
      %87 = vector.broadcast %cst_27 : f32 to vector<8x128xf32>
      %88 = arith.select %84, %80, %87 : vector<8x128xi1>, vector<8x128xf32>
      %89 = arith.addf %62, %86 : vector<8x128xf32>
      %90 = arith.addf %63, %88 : vector<8x128xf32>
      %91 = arith.mulf %86, %88 : vector<8x128xf32>
      %92 = arith.addf %65, %91 : vector<8x128xf32>
      %93 = arith.mulf %86, %86 : vector<8x128xf32>
      %94 = arith.addf %67, %93 : vector<8x128xf32>
      %95 = arith.mulf %88, %88 : vector<8x128xf32>
      %96 = arith.addf %69, %95 : vector<8x128xf32>
      %c128_i32_28 = arith.constant 128 : i32
      %97 = arith.muli %c0_i32_5, %c128_i32_28 : i32
      %c24_i32 = arith.constant 24 : i32
      %98 = arith.addi %97, %c24_i32 : i32
      %99 = tpu.assume_multiple %98, 8 : i32
      %100 = arith.index_cast %99 : i32 to index
      %c0_29 = arith.constant 0 : index
      %101 = vector.load %arg2[%100, %c0_29] : memref<128x128xf32, #tpu.memory_space<vmem>>, vector<8x128xf32>
      %cst_30 = arith.constant 0.000000e+00 : f32
      %102 = vector.broadcast %cst_30 : f32 to vector<8x128xf32>
      %103 = arith.maximumf %101, %102 : vector<8x128xf32>
      %104 = arith.index_cast %99 : i32 to index
      %c0_31 = arith.constant 0 : index
      %105 = vector.load %arg3[%104, %c0_31] : memref<128x128xf32, #tpu.memory_space<vmem>>, vector<8x128xf32>
      %cst_32 = arith.constant 0.000000e+00 : f32
      %106 = vector.broadcast %cst_32 : f32 to vector<8x128xf32>
      %107 = arith.maximumf %105, %106 : vector<8x128xf32>
      %108 = vector.broadcast %99 : i32 to vector<8x128xi32>
      %109 = arith.addi %14, %108 : vector<8x128xi32>
      %110 = vector.broadcast %13 : i32 to vector<8x128xi32>
      %111 = arith.cmpi slt, %109, %110 : vector<8x128xi32>
      %cst_33 = arith.constant 0.000000e+00 : f32
      %112 = vector.broadcast %cst_33 : f32 to vector<8x128xf32>
      %113 = arith.select %111, %103, %112 : vector<8x128xi1>, vector<8x128xf32>
      %cst_34 = arith.constant 0.000000e+00 : f32
      %114 = vector.broadcast %cst_34 : f32 to vector<8x128xf32>
      %115 = arith.select %111, %107, %114 : vector<8x128xi1>, vector<8x128xf32>
      %116 = arith.addf %89, %113 : vector<8x128xf32>
      %117 = arith.addf %90, %115 : vector<8x128xf32>
      %118 = arith.mulf %113, %115 : vector<8x128xf32>
      %119 = arith.addf %92, %118 : vector<8x128xf32>
      %120 = arith.mulf %113, %113 : vector<8x128xf32>
      %121 = arith.addf %94, %120 : vector<8x128xf32>
      %122 = arith.mulf %115, %115 : vector<8x128xf32>
      %123 = arith.addf %96, %122 : vector<8x128xf32>
      %c128_i32_35 = arith.constant 128 : i32
      %124 = arith.muli %c0_i32_5, %c128_i32_35 : i32
      %c32_i32 = arith.constant 32 : i32
      %125 = arith.addi %124, %c32_i32 : i32
      %126 = tpu.assume_multiple %125, 8 : i32
      %127 = arith.index_cast %126 : i32 to index
      %c0_36 = arith.constant 0 : index
      %128 = vector.load %arg2[%127, %c0_36] : memref<128x128xf32, #tpu.memory_space<vmem>>, vector<8x128xf32>
      %cst_37 = arith.constant 0.000000e+00 : f32
      %129 = vector.broadcast %cst_37 : f32 to vector<8x128xf32>
      %130 = arith.maximumf %128, %129 : vector<8x128xf32>
      %131 = arith.index_cast %126 : i32 to index
      %c0_38 = arith.constant 0 : index
      %132 = vector.load %arg3[%131, %c0_38] : memref<128x128xf32, #tpu.memory_space<vmem>>, vector<8x128xf32>
      %cst_39 = arith.constant 0.000000e+00 : f32
      %133 = vector.broadcast %cst_39 : f32 to vector<8x128xf32>
      %134 = arith.maximumf %132, %133 : vector<8x128xf32>
      %135 = vector.broadcast %126 : i32 to vector<8x128xi32>
      %136 = arith.addi %14, %135 : vector<8x128xi32>
      %137 = vector.broadcast %13 : i32 to vector<8x128xi32>
      %138 = arith.cmpi slt, %136, %137 : vector<8x128xi32>
      %cst_40 = arith.constant 0.000000e+00 : f32
      %139 = vector.broadcast %cst_40 : f32 to vector<8x128xf32>
      %140 = arith.select %138, %130, %139 : vector<8x128xi1>, vector<8x128xf32>
      %cst_41 = arith.constant 0.000000e+00 : f32
      %141 = vector.broadcast %cst_41 : f32 to vector<8x128xf32>
      %142 = arith.select %138, %134, %141 : vector<8x128xi1>, vector<8x128xf32>
      %143 = arith.addf %116, %140 : vector<8x128xf32>
      %144 = arith.addf %117, %142 : vector<8x128xf32>
      %145 = arith.mulf %140, %142 : vector<8x128xf32>
      %146 = arith.addf %119, %145 : vector<8x128xf32>
      %147 = arith.mulf %140, %140 : vector<8x128xf32>
      %148 = arith.addf %121, %147 : vector<8x128xf32>
      %149 = arith.mulf %142, %142 : vector<8x128xf32>
      %150 = arith.addf %123, %149 : vector<8x128xf32>
      %c128_i32_42 = arith.constant 128 : i32
      %151 = arith.muli %c0_i32_5, %c128_i32_42 : i32
      %c40_i32 = arith.constant 40 : i32
      %152 = arith.addi %151, %c40_i32 : i32
      %153 = tpu.assume_multiple %152, 8 : i32
      %154 = arith.index_cast %153 : i32 to index
      %c0_43 = arith.constant 0 : index
      %155 = vector.load %arg2[%154, %c0_43] : memref<128x128xf32, #tpu.memory_space<vmem>>, vector<8x128xf32>
      %cst_44 = arith.constant 0.000000e+00 : f32
      %156 = vector.broadcast %cst_44 : f32 to vector<8x128xf32>
      %157 = arith.maximumf %155, %156 : vector<8x128xf32>
      %158 = arith.index_cast %153 : i32 to index
      %c0_45 = arith.constant 0 : index
      %159 = vector.load %arg3[%158, %c0_45] : memref<128x128xf32, #tpu.memory_space<vmem>>, vector<8x128xf32>
      %cst_46 = arith.constant 0.000000e+00 : f32
      %160 = vector.broadcast %cst_46 : f32 to vector<8x128xf32>
      %161 = arith.maximumf %159, %160 : vector<8x128xf32>
      %162 = vector.broadcast %153 : i32 to vector<8x128xi32>
      %163 = arith.addi %14, %162 : vector<8x128xi32>
      %164 = vector.broadcast %13 : i32 to vector<8x128xi32>
      %165 = arith.cmpi slt, %163, %164 : vector<8x128xi32>
      %cst_47 = arith.constant 0.000000e+00 : f32
      %166 = vector.broadcast %cst_47 : f32 to vector<8x128xf32>
      %167 = arith.select %165, %157, %166 : vector<8x128xi1>, vector<8x128xf32>
      %cst_48 = arith.constant 0.000000e+00 : f32
      %168 = vector.broadcast %cst_48 : f32 to vector<8x128xf32>
      %169 = arith.select %165, %161, %168 : vector<8x128xi1>, vector<8x128xf32>
      %170 = arith.addf %143, %167 : vector<8x128xf32>
      %171 = arith.addf %144, %169 : vector<8x128xf32>
      %172 = arith.mulf %167, %169 : vector<8x128xf32>
      %173 = arith.addf %146, %172 : vector<8x128xf32>
      %174 = arith.mulf %167, %167 : vector<8x128xf32>
      %175 = arith.addf %148, %174 : vector<8x128xf32>
      %176 = arith.mulf %169, %169 : vector<8x128xf32>
      %177 = arith.addf %150, %176 : vector<8x128xf32>
      %c128_i32_49 = arith.constant 128 : i32
      %178 = arith.muli %c0_i32_5, %c128_i32_49 : i32
      %c48_i32 = arith.constant 48 : i32
      %179 = arith.addi %178, %c48_i32 : i32
      %180 = tpu.assume_multiple %179, 8 : i32
      %181 = arith.index_cast %180 : i32 to index
      %c0_50 = arith.constant 0 : index
      %182 = vector.load %arg2[%181, %c0_50] : memref<128x128xf32, #tpu.memory_space<vmem>>, vector<8x128xf32>
      %cst_51 = arith.constant 0.000000e+00 : f32
      %183 = vector.broadcast %cst_51 : f32 to vector<8x128xf32>
      %184 = arith.maximumf %182, %183 : vector<8x128xf32>
      %185 = arith.index_cast %180 : i32 to index
      %c0_52 = arith.constant 0 : index
      %186 = vector.load %arg3[%185, %c0_52] : memref<128x128xf32, #tpu.memory_space<vmem>>, vector<8x128xf32>
      %cst_53 = arith.constant 0.000000e+00 : f32
      %187 = vector.broadcast %cst_53 : f32 to vector<8x128xf32>
      %188 = arith.maximumf %186, %187 : vector<8x128xf32>
      %189 = vector.broadcast %180 : i32 to vector<8x128xi32>
      %190 = arith.addi %14, %189 : vector<8x128xi32>
      %191 = vector.broadcast %13 : i32 to vector<8x128xi32>
      %192 = arith.cmpi slt, %190, %191 : vector<8x128xi32>
      %cst_54 = arith.constant 0.000000e+00 : f32
      %193 = vector.broadcast %cst_54 : f32 to vector<8x128xf32>
      %194 = arith.select %192, %184, %193 : vector<8x128xi1>, vector<8x128xf32>
      %cst_55 = arith.constant 0.000000e+00 : f32
      %195 = vector.broadcast %cst_55 : f32 to vector<8x128xf32>
      %196 = arith.select %192, %188, %195 : vector<8x128xi1>, vector<8x128xf32>
      %197 = arith.addf %170, %194 : vector<8x128xf32>
      %198 = arith.addf %171, %196 : vector<8x128xf32>
      %199 = arith.mulf %194, %196 : vector<8x128xf32>
      %200 = arith.addf %173, %199 : vector<8x128xf32>
      %201 = arith.mulf %194, %194 : vector<8x128xf32>
      %202 = arith.addf %175, %201 : vector<8x128xf32>
      %203 = arith.mulf %196, %196 : vector<8x128xf32>
      %204 = arith.addf %177, %203 : vector<8x128xf32>
      %c128_i32_56 = arith.constant 128 : i32
      %205 = arith.muli %c0_i32_5, %c128_i32_56 : i32
      %c56_i32 = arith.constant 56 : i32
      %206 = arith.addi %205, %c56_i32 : i32
      %207 = tpu.assume_multiple %206, 8 : i32
      %208 = arith.index_cast %207 : i32 to index
      %c0_57 = arith.constant 0 : index
      %209 = vector.load %arg2[%208, %c0_57] : memref<128x128xf32, #tpu.memory_space<vmem>>, vector<8x128xf32>
      %cst_58 = arith.constant 0.000000e+00 : f32
      %210 = vector.broadcast %cst_58 : f32 to vector<8x128xf32>
      %211 = arith.maximumf %209, %210 : vector<8x128xf32>
      %212 = arith.index_cast %207 : i32 to index
      %c0_59 = arith.constant 0 : index
      %213 = vector.load %arg3[%212, %c0_59] : memref<128x128xf32, #tpu.memory_space<vmem>>, vector<8x128xf32>
      %cst_60 = arith.constant 0.000000e+00 : f32
      %214 = vector.broadcast %cst_60 : f32 to vector<8x128xf32>
      %215 = arith.maximumf %213, %214 : vector<8x128xf32>
      %216 = vector.broadcast %207 : i32 to vector<8x128xi32>
      %217 = arith.addi %14, %216 : vector<8x128xi32>
      %218 = vector.broadcast %13 : i32 to vector<8x128xi32>
      %219 = arith.cmpi slt, %217, %218 : vector<8x128xi32>
      %cst_61 = arith.constant 0.000000e+00 : f32
      %220 = vector.broadcast %cst_61 : f32 to vector<8x128xf32>
      %221 = arith.select %219, %211, %220 : vector<8x128xi1>, vector<8x128xf32>
      %cst_62 = arith.constant 0.000000e+00 : f32
      %222 = vector.broadcast %cst_62 : f32 to vector<8x128xf32>
      %223 = arith.select %219, %215, %222 : vector<8x128xi1>, vector<8x128xf32>
      %224 = arith.addf %197, %221 : vector<8x128xf32>
      %225 = arith.addf %198, %223 : vector<8x128xf32>
      %226 = arith.mulf %221, %223 : vector<8x128xf32>
      %227 = arith.addf %200, %226 : vector<8x128xf32>
      %228 = arith.mulf %221, %221 : vector<8x128xf32>
      %229 = arith.addf %202, %228 : vector<8x128xf32>
      %230 = arith.mulf %223, %223 : vector<8x128xf32>
      %231 = arith.addf %204, %230 : vector<8x128xf32>
      %c128_i32_63 = arith.constant 128 : i32
      %232 = arith.muli %c0_i32_5, %c128_i32_63 : i32
      %c64_i32 = arith.constant 64 : i32
      %233 = arith.addi %232, %c64_i32 : i32
      %234 = tpu.assume_multiple %233, 8 : i32
      %235 = arith.index_cast %234 : i32 to index
      %c0_64 = arith.constant 0 : index
      %236 = vector.load %arg2[%235, %c0_64] : memref<128x128xf32, #tpu.memory_space<vmem>>, vector<8x128xf32>
      %cst_65 = arith.constant 0.000000e+00 : f32
      %237 = vector.broadcast %cst_65 : f32 to vector<8x128xf32>
      %238 = arith.maximumf %236, %237 : vector<8x128xf32>
      %239 = arith.index_cast %234 : i32 to index
      %c0_66 = arith.constant 0 : index
      %240 = vector.load %arg3[%239, %c0_66] : memref<128x128xf32, #tpu.memory_space<vmem>>, vector<8x128xf32>
      %cst_67 = arith.constant 0.000000e+00 : f32
      %241 = vector.broadcast %cst_67 : f32 to vector<8x128xf32>
      %242 = arith.maximumf %240, %241 : vector<8x128xf32>
      %243 = vector.broadcast %234 : i32 to vector<8x128xi32>
      %244 = arith.addi %14, %243 : vector<8x128xi32>
      %245 = vector.broadcast %13 : i32 to vector<8x128xi32>
      %246 = arith.cmpi slt, %244, %245 : vector<8x128xi32>
      %cst_68 = arith.constant 0.000000e+00 : f32
      %247 = vector.broadcast %cst_68 : f32 to vector<8x128xf32>
      %248 = arith.select %246, %238, %247 : vector<8x128xi1>, vector<8x128xf32>
      %cst_69 = arith.constant 0.000000e+00 : f32
      %249 = vector.broadcast %cst_69 : f32 to vector<8x128xf32>
      %250 = arith.select %246, %242, %249 : vector<8x128xi1>, vector<8x128xf32>
      %251 = arith.addf %224, %248 : vector<8x128xf32>
      %252 = arith.addf %225, %250 : vector<8x128xf32>
      %253 = arith.mulf %248, %250 : vector<8x128xf32>
      %254 = arith.addf %227, %253 : vector<8x128xf32>
      %255 = arith.mulf %248, %248 : vector<8x128xf32>
      %256 = arith.addf %229, %255 : vector<8x128xf32>
      %257 = arith.mulf %250, %250 : vector<8x128xf32>
      %258 = arith.addf %231, %257 : vector<8x128xf32>
      %c128_i32_70 = arith.constant 128 : i32
      %259 = arith.muli %c0_i32_5, %c128_i32_70 : i32
      %c72_i32 = arith.constant 72 : i32
      %260 = arith.addi %259, %c72_i32 : i32
      %261 = tpu.assume_multiple %260, 8 : i32
      %262 = arith.index_cast %261 : i32 to index
      %c0_71 = arith.constant 0 : index
      %263 = vector.load %arg2[%262, %c0_71] : memref<128x128xf32, #tpu.memory_space<vmem>>, vector<8x128xf32>
      %cst_72 = arith.constant 0.000000e+00 : f32
      %264 = vector.broadcast %cst_72 : f32 to vector<8x128xf32>
      %265 = arith.maximumf %263, %264 : vector<8x128xf32>
      %266 = arith.index_cast %261 : i32 to index
      %c0_73 = arith.constant 0 : index
      %267 = vector.load %arg3[%266, %c0_73] : memref<128x128xf32, #tpu.memory_space<vmem>>, vector<8x128xf32>
      %cst_74 = arith.constant 0.000000e+00 : f32
      %268 = vector.broadcast %cst_74 : f32 to vector<8x128xf32>
      %269 = arith.maximumf %267, %268 : vector<8x128xf32>
      %270 = vector.broadcast %261 : i32 to vector<8x128xi32>
      %271 = arith.addi %14, %270 : vector<8x128xi32>
      %272 = vector.broadcast %13 : i32 to vector<8x128xi32>
      %273 = arith.cmpi slt, %271, %272 : vector<8x128xi32>
      %cst_75 = arith.constant 0.000000e+00 : f32
      %274 = vector.broadcast %cst_75 : f32 to vector<8x128xf32>
      %275 = arith.select %273, %265, %274 : vector<8x128xi1>, vector<8x128xf32>
      %cst_76 = arith.constant 0.000000e+00 : f32
      %276 = vector.broadcast %cst_76 : f32 to vector<8x128xf32>
      %277 = arith.select %273, %269, %276 : vector<8x128xi1>, vector<8x128xf32>
      %278 = arith.addf %251, %275 : vector<8x128xf32>
      %279 = arith.addf %252, %277 : vector<8x128xf32>
      %280 = arith.mulf %275, %277 : vector<8x128xf32>
      %281 = arith.addf %254, %280 : vector<8x128xf32>
      %282 = arith.mulf %275, %275 : vector<8x128xf32>
      %283 = arith.addf %256, %282 : vector<8x128xf32>
      %284 = arith.mulf %277, %277 : vector<8x128xf32>
      %285 = arith.addf %258, %284 : vector<8x128xf32>
      %c128_i32_77 = arith.constant 128 : i32
      %286 = arith.muli %c0_i32_5, %c128_i32_77 : i32
      %c80_i32 = arith.constant 80 : i32
      %287 = arith.addi %286, %c80_i32 : i32
      %288 = tpu.assume_multiple %287, 8 : i32
      %289 = arith.index_cast %288 : i32 to index
      %c0_78 = arith.constant 0 : index
      %290 = vector.load %arg2[%289, %c0_78] : memref<128x128xf32, #tpu.memory_space<vmem>>, vector<8x128xf32>
      %cst_79 = arith.constant 0.000000e+00 : f32
      %291 = vector.broadcast %cst_79 : f32 to vector<8x128xf32>
      %292 = arith.maximumf %290, %291 : vector<8x128xf32>
      %293 = arith.index_cast %288 : i32 to index
      %c0_80 = arith.constant 0 : index
      %294 = vector.load %arg3[%293, %c0_80] : memref<128x128xf32, #tpu.memory_space<vmem>>, vector<8x128xf32>
      %cst_81 = arith.constant 0.000000e+00 : f32
      %295 = vector.broadcast %cst_81 : f32 to vector<8x128xf32>
      %296 = arith.maximumf %294, %295 : vector<8x128xf32>
      %297 = vector.broadcast %288 : i32 to vector<8x128xi32>
      %298 = arith.addi %14, %297 : vector<8x128xi32>
      %299 = vector.broadcast %13 : i32 to vector<8x128xi32>
      %300 = arith.cmpi slt, %298, %299 : vector<8x128xi32>
      %cst_82 = arith.constant 0.000000e+00 : f32
      %301 = vector.broadcast %cst_82 : f32 to vector<8x128xf32>
      %302 = arith.select %300, %292, %301 : vector<8x128xi1>, vector<8x128xf32>
      %cst_83 = arith.constant 0.000000e+00 : f32
      %303 = vector.broadcast %cst_83 : f32 to vector<8x128xf32>
      %304 = arith.select %300, %296, %303 : vector<8x128xi1>, vector<8x128xf32>
      %305 = arith.addf %278, %302 : vector<8x128xf32>
      %306 = arith.addf %279, %304 : vector<8x128xf32>
      %307 = arith.mulf %302, %304 : vector<8x128xf32>
      %308 = arith.addf %281, %307 : vector<8x128xf32>
      %309 = arith.mulf %302, %302 : vector<8x128xf32>
      %310 = arith.addf %283, %309 : vector<8x128xf32>
      %311 = arith.mulf %304, %304 : vector<8x128xf32>
      %312 = arith.addf %285, %311 : vector<8x128xf32>
      %c128_i32_84 = arith.constant 128 : i32
      %313 = arith.muli %c0_i32_5, %c128_i32_84 : i32
      %c88_i32 = arith.constant 88 : i32
      %314 = arith.addi %313, %c88_i32 : i32
      %315 = tpu.assume_multiple %314, 8 : i32
      %316 = arith.index_cast %315 : i32 to index
      %c0_85 = arith.constant 0 : index
      %317 = vector.load %arg2[%316, %c0_85] : memref<128x128xf32, #tpu.memory_space<vmem>>, vector<8x128xf32>
      %cst_86 = arith.constant 0.000000e+00 : f32
      %318 = vector.broadcast %cst_86 : f32 to vector<8x128xf32>
      %319 = arith.maximumf %317, %318 : vector<8x128xf32>
      %320 = arith.index_cast %315 : i32 to index
      %c0_87 = arith.constant 0 : index
      %321 = vector.load %arg3[%320, %c0_87] : memref<128x128xf32, #tpu.memory_space<vmem>>, vector<8x128xf32>
      %cst_88 = arith.constant 0.000000e+00 : f32
      %322 = vector.broadcast %cst_88 : f32 to vector<8x128xf32>
      %323 = arith.maximumf %321, %322 : vector<8x128xf32>
      %324 = vector.broadcast %315 : i32 to vector<8x128xi32>
      %325 = arith.addi %14, %324 : vector<8x128xi32>
      %326 = vector.broadcast %13 : i32 to vector<8x128xi32>
      %327 = arith.cmpi slt, %325, %326 : vector<8x128xi32>
      %cst_89 = arith.constant 0.000000e+00 : f32
      %328 = vector.broadcast %cst_89 : f32 to vector<8x128xf32>
      %329 = arith.select %327, %319, %328 : vector<8x128xi1>, vector<8x128xf32>
      %cst_90 = arith.constant 0.000000e+00 : f32
      %330 = vector.broadcast %cst_90 : f32 to vector<8x128xf32>
      %331 = arith.select %327, %323, %330 : vector<8x128xi1>, vector<8x128xf32>
      %332 = arith.addf %305, %329 : vector<8x128xf32>
      %333 = arith.addf %306, %331 : vector<8x128xf32>
      %334 = arith.mulf %329, %331 : vector<8x128xf32>
      %335 = arith.addf %308, %334 : vector<8x128xf32>
      %336 = arith.mulf %329, %329 : vector<8x128xf32>
      %337 = arith.addf %310, %336 : vector<8x128xf32>
      %338 = arith.mulf %331, %331 : vector<8x128xf32>
      %339 = arith.addf %312, %338 : vector<8x128xf32>
      %c128_i32_91 = arith.constant 128 : i32
      %340 = arith.muli %c0_i32_5, %c128_i32_91 : i32
      %c96_i32 = arith.constant 96 : i32
      %341 = arith.addi %340, %c96_i32 : i32
      %342 = tpu.assume_multiple %341, 8 : i32
      %343 = arith.index_cast %342 : i32 to index
      %c0_92 = arith.constant 0 : index
      %344 = vector.load %arg2[%343, %c0_92] : memref<128x128xf32, #tpu.memory_space<vmem>>, vector<8x128xf32>
      %cst_93 = arith.constant 0.000000e+00 : f32
      %345 = vector.broadcast %cst_93 : f32 to vector<8x128xf32>
      %346 = arith.maximumf %344, %345 : vector<8x128xf32>
      %347 = arith.index_cast %342 : i32 to index
      %c0_94 = arith.constant 0 : index
      %348 = vector.load %arg3[%347, %c0_94] : memref<128x128xf32, #tpu.memory_space<vmem>>, vector<8x128xf32>
      %cst_95 = arith.constant 0.000000e+00 : f32
      %349 = vector.broadcast %cst_95 : f32 to vector<8x128xf32>
      %350 = arith.maximumf %348, %349 : vector<8x128xf32>
      %351 = vector.broadcast %342 : i32 to vector<8x128xi32>
      %352 = arith.addi %14, %351 : vector<8x128xi32>
      %353 = vector.broadcast %13 : i32 to vector<8x128xi32>
      %354 = arith.cmpi slt, %352, %353 : vector<8x128xi32>
      %cst_96 = arith.constant 0.000000e+00 : f32
      %355 = vector.broadcast %cst_96 : f32 to vector<8x128xf32>
      %356 = arith.select %354, %346, %355 : vector<8x128xi1>, vector<8x128xf32>
      %cst_97 = arith.constant 0.000000e+00 : f32
      %357 = vector.broadcast %cst_97 : f32 to vector<8x128xf32>
      %358 = arith.select %354, %350, %357 : vector<8x128xi1>, vector<8x128xf32>
      %359 = arith.addf %332, %356 : vector<8x128xf32>
      %360 = arith.addf %333, %358 : vector<8x128xf32>
      %361 = arith.mulf %356, %358 : vector<8x128xf32>
      %362 = arith.addf %335, %361 : vector<8x128xf32>
      %363 = arith.mulf %356, %356 : vector<8x128xf32>
      %364 = arith.addf %337, %363 : vector<8x128xf32>
      %365 = arith.mulf %358, %358 : vector<8x128xf32>
      %366 = arith.addf %339, %365 : vector<8x128xf32>
      %c128_i32_98 = arith.constant 128 : i32
      %367 = arith.muli %c0_i32_5, %c128_i32_98 : i32
      %c104_i32 = arith.constant 104 : i32
      %368 = arith.addi %367, %c104_i32 : i32
      %369 = tpu.assume_multiple %368, 8 : i32
      %370 = arith.index_cast %369 : i32 to index
      %c0_99 = arith.constant 0 : index
      %371 = vector.load %arg2[%370, %c0_99] : memref<128x128xf32, #tpu.memory_space<vmem>>, vector<8x128xf32>
      %cst_100 = arith.constant 0.000000e+00 : f32
      %372 = vector.broadcast %cst_100 : f32 to vector<8x128xf32>
      %373 = arith.maximumf %371, %372 : vector<8x128xf32>
      %374 = arith.index_cast %369 : i32 to index
      %c0_101 = arith.constant 0 : index
      %375 = vector.load %arg3[%374, %c0_101] : memref<128x128xf32, #tpu.memory_space<vmem>>, vector<8x128xf32>
      %cst_102 = arith.constant 0.000000e+00 : f32
      %376 = vector.broadcast %cst_102 : f32 to vector<8x128xf32>
      %377 = arith.maximumf %375, %376 : vector<8x128xf32>
      %378 = vector.broadcast %369 : i32 to vector<8x128xi32>
      %379 = arith.addi %14, %378 : vector<8x128xi32>
      %380 = vector.broadcast %13 : i32 to vector<8x128xi32>
      %381 = arith.cmpi slt, %379, %380 : vector<8x128xi32>
      %cst_103 = arith.constant 0.000000e+00 : f32
      %382 = vector.broadcast %cst_103 : f32 to vector<8x128xf32>
      %383 = arith.select %381, %373, %382 : vector<8x128xi1>, vector<8x128xf32>
      %cst_104 = arith.constant 0.000000e+00 : f32
      %384 = vector.broadcast %cst_104 : f32 to vector<8x128xf32>
      %385 = arith.select %381, %377, %384 : vector<8x128xi1>, vector<8x128xf32>
      %386 = arith.addf %359, %383 : vector<8x128xf32>
      %387 = arith.addf %360, %385 : vector<8x128xf32>
      %388 = arith.mulf %383, %385 : vector<8x128xf32>
      %389 = arith.addf %362, %388 : vector<8x128xf32>
      %390 = arith.mulf %383, %383 : vector<8x128xf32>
      %391 = arith.addf %364, %390 : vector<8x128xf32>
      %392 = arith.mulf %385, %385 : vector<8x128xf32>
      %393 = arith.addf %366, %392 : vector<8x128xf32>
      %c128_i32_105 = arith.constant 128 : i32
      %394 = arith.muli %c0_i32_5, %c128_i32_105 : i32
      %c112_i32 = arith.constant 112 : i32
      %395 = arith.addi %394, %c112_i32 : i32
      %396 = tpu.assume_multiple %395, 8 : i32
      %397 = arith.index_cast %396 : i32 to index
      %c0_106 = arith.constant 0 : index
      %398 = vector.load %arg2[%397, %c0_106] : memref<128x128xf32, #tpu.memory_space<vmem>>, vector<8x128xf32>
      %cst_107 = arith.constant 0.000000e+00 : f32
      %399 = vector.broadcast %cst_107 : f32 to vector<8x128xf32>
      %400 = arith.maximumf %398, %399 : vector<8x128xf32>
      %401 = arith.index_cast %396 : i32 to index
      %c0_108 = arith.constant 0 : index
      %402 = vector.load %arg3[%401, %c0_108] : memref<128x128xf32, #tpu.memory_space<vmem>>, vector<8x128xf32>
      %cst_109 = arith.constant 0.000000e+00 : f32
      %403 = vector.broadcast %cst_109 : f32 to vector<8x128xf32>
      %404 = arith.maximumf %402, %403 : vector<8x128xf32>
      %405 = vector.broadcast %396 : i32 to vector<8x128xi32>
      %406 = arith.addi %14, %405 : vector<8x128xi32>
      %407 = vector.broadcast %13 : i32 to vector<8x128xi32>
      %408 = arith.cmpi slt, %406, %407 : vector<8x128xi32>
      %cst_110 = arith.constant 0.000000e+00 : f32
      %409 = vector.broadcast %cst_110 : f32 to vector<8x128xf32>
      %410 = arith.select %408, %400, %409 : vector<8x128xi1>, vector<8x128xf32>
      %cst_111 = arith.constant 0.000000e+00 : f32
      %411 = vector.broadcast %cst_111 : f32 to vector<8x128xf32>
      %412 = arith.select %408, %404, %411 : vector<8x128xi1>, vector<8x128xf32>
      %413 = arith.addf %386, %410 : vector<8x128xf32>
      %414 = arith.addf %387, %412 : vector<8x128xf32>
      %415 = arith.mulf %410, %412 : vector<8x128xf32>
      %416 = arith.addf %389, %415 : vector<8x128xf32>
      %417 = arith.mulf %410, %410 : vector<8x128xf32>
      %418 = arith.addf %391, %417 : vector<8x128xf32>
      %419 = arith.mulf %412, %412 : vector<8x128xf32>
      %420 = arith.addf %393, %419 : vector<8x128xf32>
      %c128_i32_112 = arith.constant 128 : i32
      %421 = arith.muli %c0_i32_5, %c128_i32_112 : i32
      %c120_i32 = arith.constant 120 : i32
      %422 = arith.addi %421, %c120_i32 : i32
      %423 = tpu.assume_multiple %422, 8 : i32
      %424 = arith.index_cast %423 : i32 to index
      %c0_113 = arith.constant 0 : index
      %425 = vector.load %arg2[%424, %c0_113] : memref<128x128xf32, #tpu.memory_space<vmem>>, vector<8x128xf32>
      %cst_114 = arith.constant 0.000000e+00 : f32
      %426 = vector.broadcast %cst_114 : f32 to vector<8x128xf32>
      %427 = arith.maximumf %425, %426 : vector<8x128xf32>
      %428 = arith.index_cast %423 : i32 to index
      %c0_115 = arith.constant 0 : index
      %429 = vector.load %arg3[%428, %c0_115] : memref<128x128xf32, #tpu.memory_space<vmem>>, vector<8x128xf32>
      %cst_116 = arith.constant 0.000000e+00 : f32
      %430 = vector.broadcast %cst_116 : f32 to vector<8x128xf32>
      %431 = arith.maximumf %429, %430 : vector<8x128xf32>
      %432 = vector.broadcast %423 : i32 to vector<8x128xi32>
      %433 = arith.addi %14, %432 : vector<8x128xi32>
      %434 = vector.broadcast %13 : i32 to vector<8x128xi32>
      %435 = arith.cmpi slt, %433, %434 : vector<8x128xi32>
      %cst_117 = arith.constant 0.000000e+00 : f32
      %436 = vector.broadcast %cst_117 : f32 to vector<8x128xf32>
      %437 = arith.select %435, %427, %436 : vector<8x128xi1>, vector<8x128xf32>
      %cst_118 = arith.constant 0.000000e+00 : f32
      %438 = vector.broadcast %cst_118 : f32 to vector<8x128xf32>
      %439 = arith.select %435, %431, %438 : vector<8x128xi1>, vector<8x128xf32>
      %440 = arith.addf %413, %437 : vector<8x128xf32>
      %441 = arith.addf %414, %439 : vector<8x128xf32>
      %442 = arith.mulf %437, %439 : vector<8x128xf32>
      %443 = arith.addf %416, %442 : vector<8x128xf32>
      %444 = arith.mulf %437, %437 : vector<8x128xf32>
      %445 = arith.addf %418, %444 : vector<8x128xf32>
      %446 = arith.mulf %439, %439 : vector<8x128xf32>
      %447 = arith.addf %420, %446 : vector<8x128xf32>
      %c1_i32_119 = arith.constant 1 : i32
      %c0_120 = arith.constant 0 : index
      %c0_121 = arith.constant 0 : index
      %c0_122 = arith.constant 0 : index
      %448 = vector.load %arg4[%c0_120, %c0_121, %c0_122] : memref<5x8x128xf32, #tpu.memory_space<vmem>>, vector<1x8x128xf32>
      %449 = vector.shape_cast %448 : vector<1x8x128xf32> to vector<8x128xf32>
      %450 = arith.addf %449, %440 : vector<8x128xf32>
      %c0_123 = arith.constant 0 : index
      %c0_124 = arith.constant 0 : index
      %c0_125 = arith.constant 0 : index
      %451 = vector.load %arg4[%c0_123, %c0_124, %c0_125] : memref<5x8x128xf32, #tpu.memory_space<vmem>>, vector<1x8x128xf32>
      %452 = vector.shape_cast %451 : vector<1x8x128xf32> to vector<8x128xf32>
      %453 = vector.shape_cast %450 : vector<8x128xf32> to vector<1x8x128xf32>
      tpu.vector_store %arg4[%c0_123, %c0_124, %c0_125], %453 {strides = array<i32>} : memref<5x8x128xf32, #tpu.memory_space<vmem>>, vector<1x8x128xf32>,
      %c1 = arith.constant 1 : index
      %c0_126 = arith.constant 0 : index
      %c0_127 = arith.constant 0 : index
      %454 = vector.load %arg4[%c1, %c0_126, %c0_127] : memref<5x8x128xf32, #tpu.memory_space<vmem>>, vector<1x8x128xf32>
      %455 = vector.shape_cast %454 : vector<1x8x128xf32> to vector<8x128xf32>
      %456 = arith.addf %455, %441 : vector<8x128xf32>
      %c1_128 = arith.constant 1 : index
      %c0_129 = arith.constant 0 : index
      %c0_130 = arith.constant 0 : index
      %457 = vector.load %arg4[%c1_128, %c0_129, %c0_130] : memref<5x8x128xf32, #tpu.memory_space<vmem>>, vector<1x8x128xf32>
      %458 = vector.shape_cast %457 : vector<1x8x128xf32> to vector<8x128xf32>
      %459 = vector.shape_cast %456 : vector<8x128xf32> to vector<1x8x128xf32>
      tpu.vector_store %arg4[%c1_128, %c0_129, %c0_130], %459 {strides = array<i32>} : memref<5x8x128xf32, #tpu.memory_space<vmem>>, vector<1x8x128xf32>,
      %c2 = arith.constant 2 : index
      %c0_131 = arith.constant 0 : index
      %c0_132 = arith.constant 0 : index
      %460 = vector.load %arg4[%c2, %c0_131, %c0_132] : memref<5x8x128xf32, #tpu.memory_space<vmem>>, vector<1x8x128xf32>
      %461 = vector.shape_cast %460 : vector<1x8x128xf32> to vector<8x128xf32>
      %462 = arith.addf %461, %443 : vector<8x128xf32>
      %c2_133 = arith.constant 2 : index
      %c0_134 = arith.constant 0 : index
      %c0_135 = arith.constant 0 : index
      %463 = vector.load %arg4[%c2_133, %c0_134, %c0_135] : memref<5x8x128xf32, #tpu.memory_space<vmem>>, vector<1x8x128xf32>
      %464 = vector.shape_cast %463 : vector<1x8x128xf32> to vector<8x128xf32>
      %465 = vector.shape_cast %462 : vector<8x128xf32> to vector<1x8x128xf32>
      tpu.vector_store %arg4[%c2_133, %c0_134, %c0_135], %465 {strides = array<i32>} : memref<5x8x128xf32, #tpu.memory_space<vmem>>, vector<1x8x128xf32>,
      %c3 = arith.constant 3 : index
      %c0_136 = arith.constant 0 : index
      %c0_137 = arith.constant 0 : index
      %466 = vector.load %arg4[%c3, %c0_136, %c0_137] : memref<5x8x128xf32, #tpu.memory_space<vmem>>, vector<1x8x128xf32>
      %467 = vector.shape_cast %466 : vector<1x8x128xf32> to vector<8x128xf32>
      %468 = arith.addf %467, %445 : vector<8x128xf32>
      %c3_138 = arith.constant 3 : index
      %c0_139 = arith.constant 0 : index
      %c0_140 = arith.constant 0 : index
      %469 = vector.load %arg4[%c3_138, %c0_139, %c0_140] : memref<5x8x128xf32, #tpu.memory_space<vmem>>, vector<1x8x128xf32>
      %470 = vector.shape_cast %469 : vector<1x8x128xf32> to vector<8x128xf32>
      %471 = vector.shape_cast %468 : vector<8x128xf32> to vector<1x8x128xf32>
      tpu.vector_store %arg4[%c3_138, %c0_139, %c0_140], %471 {strides = array<i32>} : memref<5x8x128xf32, #tpu.memory_space<vmem>>, vector<1x8x128xf32>,
      %c4 = arith.constant 4 : index
      %c0_141 = arith.constant 0 : index
      %c0_142 = arith.constant 0 : index
      %472 = vector.load %arg4[%c4, %c0_141, %c0_142] : memref<5x8x128xf32, #tpu.memory_space<vmem>>, vector<1x8x128xf32>
      %473 = vector.shape_cast %472 : vector<1x8x128xf32> to vector<8x128xf32>
      %474 = arith.addf %473, %447 : vector<8x128xf32>
      %c4_143 = arith.constant 4 : index
      %c0_144 = arith.constant 0 : index
      %c0_145 = arith.constant 0 : index
      %475 = vector.load %arg4[%c4_143, %c0_144, %c0_145] : memref<5x8x128xf32, #tpu.memory_space<vmem>>, vector<1x8x128xf32>
      %476 = vector.shape_cast %475 : vector<1x8x128xf32> to vector<8x128xf32>
      %477 = vector.shape_cast %474 : vector<8x128xf32> to vector<1x8x128xf32>
      tpu.vector_store %arg4[%c4_143, %c0_144, %c0_145], %477 {strides = array<i32>} : memref<5x8x128xf32, #tpu.memory_space<vmem>>, vector<1x8x128xf32>,
    } else {
    }
    return
  }
  func.func @transform_0(%arg0: i32, %arg1: i32) -> (i32, i32) {
    %c1_i32 = arith.constant 1 : i32
    %0 = arith.muli %arg0, %c1_i32 : i32
    %1 = arith.addi %0, %arg1 : i32
    %c0_i32 = arith.constant 0 : i32
    %2 = arith.minsi %1, %c0_i32 : i32
    %c0_i32_0 = arith.constant 0 : i32
    %c0_i32_1 = arith.constant 0 : i32
    return %2, %c0_i32_0 : i32, i32
  }
  func.func @transform_1(%arg0: i32, %arg1: i32) -> (i32, i32) {
    %c1_i32 = arith.constant 1 : i32
    %0 = arith.muli %arg0, %c1_i32 : i32
    %1 = arith.addi %0, %arg1 : i32
    %c0_i32 = arith.constant 0 : i32
    %2 = arith.minsi %1, %c0_i32 : i32
    %c0_i32_0 = arith.constant 0 : i32
    %c0_i32_1 = arith.constant 0 : i32
    return %2, %c0_i32_0 : i32, i32
  }
  func.func @transform_2(%arg0: i32, %arg1: i32) -> (i32, i32, i32) {
    %c0_i32 = arith.constant 0 : i32
    %c0_i32_0 = arith.constant 0 : i32
    %c0_i32_1 = arith.constant 0 : i32
    return %arg0, %c0_i32, %c0_i32_0 : i32, i32, i32
  }
}

</mosaic_0001>

<llo_original>
// kernel: tpu_custom_call.1
$region0: #{tpu_custom_call.1}
  #allocation0 [shape = 'u32[]', space=smem, size = 0x4, offset = 0x4, fixed_abs, tag = 'smem constant byte address 0x4 - core index']
  #allocation1 [shape = 'u32[72,128]{1,0:T(1,128)}', space=vmem, size = 0x9000, scoped, tag = 'internal scratch']
  %s0 = inlined_call_operand.hbm [shape: f32[16,128], index: 0, kind: input, shape index: {}]
  %s1 = inlined_call_operand.hbm [shape: f32[16,128], index: 1, kind: input, shape index: {}]
  %s2 = inlined_call_operand.hbm [shape: f32[10,8,128], index: 2, kind: output, shape index: {}]
  %s3 = sld [smem:[#allocation0]]
  $region61: #{tpu_custom_call.1} parent=0
    _
  %s5 = ssub.s32 1, %s3
  %s6 = scalar_select 0, %s5, %s3
  $region1: #{tpu_custom_call.1} parent=0
    #allocation2 [shape = 'u8[131072]{0}', space=vmem, size = 0x20000, scoped, tag = 'input window, operand 0']
    #allocation3 [shape = 's32[2]{0}', space=sflag, size = 0x8, scoped, tag = 'scoped memory for tpu_custom_call.1']
    #allocation4 [shape = 's32[2]{0}', space=sflag, size = 0x8, scoped, tag = 'scoped memory for tpu_custom_call.1']
    #allocation5 [shape = 'u8[131072]{0}', space=vmem, size = 0x20000, scoped, tag = 'input window, operand 1']
    #allocation6 [shape = 's32[2]{0}', space=sflag, size = 0x8, scoped, tag = 'scoped memory for tpu_custom_call.1']
    #allocation7 [shape = 'u8[40960]{0}', space=vmem, size = 0xa000, scoped, tag = 'output window, operand 0']
    %7 = vsyncpa [#allocation3], 0
    %s8 = scalar_lea.sflag [#allocation3], 1
    %9 = vsyncpa %s8, 0
    %10 = vsyncpa [#allocation6], 0
    %s11 = scalar_lea.sflag [#allocation6], 1
    %12 = vsyncpa %s11, 0
    %13 = vsyncpa [#allocation4], 0
    %s14 = scalar_lea.sflag [#allocation4], 1
    %15 = vsyncpa %s14, 0
    loop: start=0, step=1, limit=4
    $region2: #{tpu_custom_call.1} parent=1 // loop_pre_header
      _
    $region3: #{tpu_custom_call.1} parent=1 // loop_header
      %s17 = sphi 0, %s21
      %p18 = scmp.ge.s32.totalorder %s17, 4
      %s24 = sphi 0, %s36
      %s25 = sphi 0, %s32
      %s26 = sphi 0, %s24
      %s27 = sphi 0, %s25
      %s28 = sphi 0, %s26
      %s29 = sphi 0, %s27
      %s45 = sphi 0, %s47
      %s48 = sphi 0, %s45
      %s49 = sphi 0, %s48
      %s65 = sphi 0, %s49
      %s77 = sphi 0, %s79
      %s80 = sphi 0, %s77
      %s81 = sphi 0, %s80
      %s97 = sphi 0, %s81
      %s103 = sphi 0, %s105
      %s106 = sphi 0, %s103
      %s107 = sphi 0, %s106
      %s123 = sphi 0, %s107
    $region4: #{tpu_custom_call.1} parent=1 // loop_header_branch
      %20 = sbr.rel (%p18) target = $region8
    $region5: #{tpu_custom_call.1} parent=1 // loop_body
      %s22 = ssub.s32 %s17, 1
      %s23 = ssub.s32 %s17, 2
      %s30 = sadd.s32 1, %s25
      %p31 = scmp.ge.s32.totalorder %s30, 1
      %s32 = scalar_select %p31, 0, %s30
      %s33 = sadd.s32 1, %s24
      %s34 = scalar_select %p31, %s33, %s24
      %p35 = scmp.ge.s32.totalorder %s34, 2
      %s36 = scalar_select %p35, 0, %s34
      %s37 = sadd.s32 %s24, %s25
      %p38 = scmp.lt.s32.totalorder %s37, 0
      %s39 = scalar_select %p38, %s37, 0
      %s40 = sadd.s32 %s36, %s32
      %p41 = scmp.lt.s32.totalorder %s40, 0
      %s42 = scalar_select %p41, %s40, 0
      %s43 = ssub.s32 %s39, %s42
      %p44 = scmp.eq.s32.totalorder %s43, 0
      %s46 = sadd.s32 %s45, 1
      %s47 = scalar_select %p44, %s45, %s46
      %p50 = pneg %p44
      %p51 = scmp.eq.s32.totalorder %s17, 1
      %p52 = por %p50, %p51
      %p53 = scmp.ne.s32.totalorder %s45, %s48
      %p54 = scmp.eq.s32.totalorder %s17, 0
      %p55 = por %p53, %p54
      %p56 = scmp.ne.s32.totalorder %s45, %s48
      %p57 = scmp.eq.s32.totalorder %s22, 1
      %p58 = por %p56, %p57
      %p59 = scmp.ne.s32.totalorder %s48, %s49
      %p60 = scmp.eq.s32.totalorder %s22, 0
      %p61 = por %p59, %p60
      %p62 = scmp.ne.s32.totalorder %s48, %s49
      %p63 = scmp.eq.s32.totalorder %s23, 1
      %p64 = por %p62, %p63
      %p66 = scmp.ne.s32.totalorder %s49, %s65
      %p67 = scmp.eq.s32.totalorder %s23, 0
      %p68 = por %p66, %p67
      %s69 = sadd.s32 %s24, %s25
      %p70 = scmp.lt.s32.totalorder %s69, 0
      %s71 = scalar_select %p70, %s69, 0
      %s72 = sadd.s32 %s36, %s32
      %p73 = scmp.lt.s32.totalorder %s72, 0
      %s74 = scalar_select %p73, %s72, 0
      %s75 = ssub.s32 %s71, %s74
      %p76 = scmp.eq.s32.totalorder %s75, 0
      %s78 = sadd.s32 %s77, 1
      %s79 = scalar_select %p76, %s77, %s78
      %p82 = pneg %p76
      %p83 = scmp.eq.s32.totalorder %s17, 1
      %p84 = por %p82, %p83
      %p85 = scmp.ne.s32.totalorder %s77, %s80
      %p86 = scmp.eq.s32.totalorder %s17, 0
      %p87 = por %p85, %p86
      %p88 = scmp.ne.s32.totalorder %s77, %s80
      %p89 = scmp.eq.s32.totalorder %s22, 1
      %p90 = por %p88, %p89
      %p91 = scmp.ne.s32.totalorder %s80, %s81
      %p92 = scmp.eq.s32.totalorder %s22, 0
      %p93 = por %p91, %p92
      %p94 = scmp.ne.s32.totalorder %s80, %s81
      %p95 = scmp.eq.s32.totalorder %s23, 1
      %p96 = por %p94, %p95
      %p98 = scmp.ne.s32.totalorder %s81, %s97
      %p99 = scmp.eq.s32.totalorder %s23, 0
      %p100 = por %p98, %p99
      %s101 = ssub.s32 %s24, %s36
      %p102 = scmp.eq.s32.totalorder %s101, 0
      %s104 = sadd.s32 %s103, 1
      %s105 = scalar_select %p102, %s103, %s104
      %p108 = pneg %p102
      %p109 = scmp.eq.s32.totalorder %s17, 1
      %p110 = por %p108, %p109
      %p111 = scmp.ne.s32.totalorder %s103, %s106
      %p112 = scmp.eq.s32.totalorder %s17, 0
      %p113 = por %p111, %p112
      %p114 = scmp.ne.s32.totalorder %s103, %s106
      %p115 = scmp.eq.s32.totalorder %s22, 1
      %p116 = por %p114, %p115
      %p117 = scmp.ne.s32.totalorder %s106, %s107
      %p118 = scmp.eq.s32.totalorder %s22, 0
      %p119 = por %p117, %p118
      %p120 = scmp.ne.s32.totalorder %s106, %s107
      %p121 = scmp.eq.s32.totalorder %s23, 1
      %p122 = por %p120, %p121
      %p124 = scmp.ne.s32.totalorder %s107, %s123
      %p125 = scmp.eq.s32.totalorder %s23, 0
      %p126 = por %p124, %p125
      %p127 = scmp.le.s32.totalorder 1, %s17
      %p128 = scmp.lt.s32.totalorder %s17, 3
      %p129 = pnand %p127, %p128
      %p130 = pneg %p129
      // Predicated region
      $region9: #{tpu_custom_call.1} parent=5 // pred_check
        _
      $region10: #{tpu_custom_call.1} parent=5 // pred_check_branch
        %132 = sbr.rel (%p129) target = $region12
      $region11: #{tpu_custom_call.1} parent=5 // pred_region
        %s133 = ssub.s32 %s17, 1
      $region12: #{tpu_custom_call.1} parent=5 // pred_fallthru
        _
      %p134 = scmp.lt.s32.totalorder %s17, 2
      // Predicated region
      $region13: #{tpu_custom_call.1} parent=5 // pred_check
        %p135 = pneg %p134
      $region14: #{tpu_custom_call.1} parent=5 // pred_check_branch
        %137 = sbr.rel (%p135) target = $region16
      $region15: #{tpu_custom_call.1} parent=5 // pred_region
        // Predicated region
        $region17: #{tpu_custom_call.1} parent=15 // pred_check
          %p138 = pneg %p55
        $region18: #{tpu_custom_call.1} parent=15 // pred_check_branch
          %140 = sbr.rel (%p138) target = $region20
        $region19: #{tpu_custom_call.1} parent=15 // pred_region
          %s141 = sand.u32 %s45, 1
          %s142 = scalar_lea.sflag [#allocation3], %s141
          %s143 = sand.u32 %s45, 1
          %s144 = smul.addr %s143, 128
          %s145 = scalar_lea.vmem [#allocation2], %s144
          %s146 = sadd.s32 %s24, %s25
          %p147 = scmp.lt.s32.totalorder %s146, 0
          %s148 = scalar_select %p147, %s146, 0
          %s149 = smul.u32 16, %s148
          %s150 = ssub.s32 2, %s149
          %s151 = smul.u32 8, %s150
          %s152 = ssub.s32 128, %s151
          %s153 = sshll.u32 %s152, 4
          %154 = vsyncadd %s142, %s153
          %p155 = scmp.ne.s32.totalorder 0, %s151
          %s156 = smul.addr %s149, 8
          %s157 = scalar_lea.hbm %s0, %s156
          %s158 = smul.u32 8, %s150
          %s159 = sshll.u32 %s157, 4
          %s160 = int_to_ptr.hbm [resolvable:$true] %s159
          %s161 = sshll.u32 %s145, 4
          %s162 = int_to_ptr.vmem [resolvable:$true] %s161
          %s163 = sshll.u32 %s158, 4
          %167 = dma.hbm_to_vmem [thread:$0]  (%p155), %s160, %s163, %s162, %s142, 128, 128, 8
        $region20: #{tpu_custom_call.1} parent=15 // pred_fallthru
          _
        // Predicated region
        $region21: #{tpu_custom_call.1} parent=15 // pred_check
          %p168 = pneg %p87
        $region22: #{tpu_custom_call.1} parent=15 // pred_check_branch
          %170 = sbr.rel (%p168) target = $region24
        $region23: #{tpu_custom_call.1} parent=15 // pred_region
          %s171 = sand.u32 %s77, 1
          %s172 = scalar_lea.sflag [#allocation6], %s171
          %s173 = sand.u32 %s77, 1
          %s174 = smul.addr %s173, 128
          %s175 = scalar_lea.vmem [#allocation5], %s174
          %s176 = sadd.s32 %s24, %s25
          %p177 = scmp.lt.s32.totalorder %s176, 0
          %s178 = scalar_select %p177, %s176, 0
          %s179 = smul.u32 16, %s178
          %s180 = ssub.s32 2, %s179
          %s181 = smul.u32 8, %s180
          %s182 = ssub.s32 128, %s181
          %s183 = sshll.u32 %s182, 4
          %184 = vsyncadd %s172, %s183
          %p185 = scmp.ne.s32.totalorder 0, %s181
          %s186 = smul.addr %s179, 8
          %s187 = scalar_lea.hbm %s1, %s186
          %s188 = smul.u32 8, %s180
          %s189 = sshll.u32 %s187, 4
          %s190 = int_to_ptr.hbm [resolvable:$true] %s189
          %s191 = sshll.u32 %s175, 4
          %s192 = int_to_ptr.vmem [resolvable:$true] %s191
          %s193 = sshll.u32 %s188, 4
          %197 = dma.hbm_to_vmem [thread:$0]  (%p185), %s190, %s193, %s192, %s172, 128, 128, 8
        $region24: #{tpu_custom_call.1} parent=15 // pred_fallthru
          _
      $region16: #{tpu_custom_call.1} parent=5 // pred_fallthru
        _
      %p198 = scmp.le.s32.totalorder 1, %s17
      %p199 = scmp.lt.s32.totalorder %s17, 3
      %p200 = pnand %p198, %p199
      %p201 = pneg %p200
      // Predicated region
      $region25: #{tpu_custom_call.1} parent=5 // pred_check
        _
      $region26: #{tpu_custom_call.1} parent=5 // pred_check_branch
        %203 = sbr.rel (%p200) target = $region28
      $region27: #{tpu_custom_call.1} parent=5 // pred_region
        %s204 = ssub.s32 %s17, 1
        %s205 = sand.u32 %s48, 1
        %s206 = scalar_lea.sflag [#allocation3], %s205
        %s207 = sand.u32 %s48, 1
        %s208 = smul.addr %s207, 128
        %s209 = scalar_lea.vmem [#allocation2], %s208
        // Predicated region
        $region29: #{tpu_custom_call.1} parent=27 // pred_check
          %p210 = pneg %p61
        $region30: #{tpu_custom_call.1} parent=27 // pred_check_branch
          %212 = sbr.rel (%p210) target = $region32
        $region31: #{tpu_custom_call.1} parent=27 // pred_region
          %214 = dma.done %s206, 2048
        $region32: #{tpu_custom_call.1} parent=27 // pred_fallthru
          _
        %s215 = sand.u32 %s80, 1
        %s216 = scalar_lea.sflag [#allocation6], %s215
        %s217 = sand.u32 %s80, 1
        %s218 = smul.addr %s217, 128
        %s219 = scalar_lea.vmem [#allocation5], %s218
        // Predicated region
        $region33: #{tpu_custom_call.1} parent=27 // pred_check
          %p220 = pneg %p93
        $region34: #{tpu_custom_call.1} parent=27 // pred_check_branch
          %222 = sbr.rel (%p220) target = $region36
        $region35: #{tpu_custom_call.1} parent=27 // pred_region
          %224 = dma.done %s216, 2048
        $region36: #{tpu_custom_call.1} parent=27 // pred_fallthru
          _
        %s225 = sand.u32 %s48, 1
        %s226 = scalar_lea.sflag [#allocation3], %s225
        %s227 = sand.u32 %s48, 1
        %s228 = smul.addr %s227, 128
        %s229 = scalar_lea.vmem [#allocation2], %s228
        %p230 = pneg %p61
        %p231 = pneg %p58
        %s232 = sand.u32 %s80, 1
        %s233 = scalar_lea.sflag [#allocation6], %s232
        %s234 = sand.u32 %s80, 1
        %s235 = smul.addr %s234, 128
        %s236 = scalar_lea.vmem [#allocation5], %s235
        %p237 = pneg %p93
        %p238 = pneg %p90
        %p239 = pneg %p119
        %p240 = pneg %p116
        %s241 = sand.u32 %s106, 1
        %s242 = scalar_lea.sflag [#allocation4], %s241
        %s243 = sand.u32 %s106, 1
        %s244 = smul.addr %s243, 40
        %s245 = scalar_lea.vmem [#allocation7], %s244
        %s246 = sadd.s32 %s26, %s27
        %p247 = scmp.lt.s32.totalorder %s246, 0
        %s248 = scalar_select %p247, %s246, 0
        %s249 = smul.u32 16, %s248
        %s250 = ssub.s32 2, %s249
        %s251 = smul.u32 8, %s250
        %s252 = sadd.s32 %s26, %s27
        %p253 = scmp.lt.s32.totalorder %s252, 0
        %s254 = scalar_select %p253, %s252, 0
        %s255 = smul.u32 16, %s254
        %s256 = ssub.s32 2, %s255
        %s257 = smul.u32 8, %s256
        %s258 = smul.u32 5, %s26
        %p259 = scmp.eq.s32.totalorder %s27, 0
        // Predicated region
        $region37: #{tpu_custom_call.1} parent=27 // pred_check
          %p260 = pneg %p259
        $region38: #{tpu_custom_call.1} parent=27 // pred_check_branch
          %262 = sbr.rel (%p260) target = $region40
        $region39: #{tpu_custom_call.1} parent=27 // pred_region
          %263 = vst [vmem:[%s245] sm:$0xff] 0.0
          %264 = vst [vmem:[%s245 + $0x8] sm:$0xff] 0.0
          %265 = vst [vmem:[%s245 + $0x10] sm:$0xff] 0.0
          %266 = vst [vmem:[%s245 + $0x18] sm:$0xff] 0.0
          %267 = vst [vmem:[%s245 + $0x20] sm:$0xff] 0.0
        $region40: #{tpu_custom_call.1} parent=27 // pred_fallthru
          _
        %s268 = sadd.s32 %s26, %s27
        %s269 = smul.u32 %s268, 128
        %s270 = sadd.s32 %s269, 128
        %p271 = scmp.le.s32.totalorder %s270, 16
        // Predicated region
        $region41: #{tpu_custom_call.1} parent=27 // pred_check
          %p272 = pneg %p271
        $region42: #{tpu_custom_call.1} parent=27 // pred_check_branch
          %274 = sbr.rel (%p272) target = $region44
        $region43: #{tpu_custom_call.1} parent=27 // pred_region
          %v275 = vld [vmem:[%s209] sm:$0xff]
          %v276 = vmax.f32 %v275, 0.0
          %v277 = vld [vmem:[%s219] sm:$0xff]
          %v278 = vmax.f32 %v277, 0.0
          %v279 = vadd.f32 %v276, 0.0
          %v280 = vadd.f32 %v278, 0.0
          %v281 = vmul.f32 %v276, %v278
          %v282 = vadd.f32 %v281, 0.0
          %v283 = vmul.f32 %v276, %v276
          %v284 = vadd.f32 %v283, 0.0
          %v285 = vmul.f32 %v278, %v278
          %v286 = vadd.f32 %v285, 0.0
          %s287 = scalar_lea.vmem %s209, 8 [#allocation2]
          %v288 = vld [vmem:[%s287] sm:$0xff]
          %v289 = vmax.f32 %v288, 0.0
          %s290 = scalar_lea.vmem %s219, 8 [#allocation5]
          %v291 = vld [vmem:[%s290] sm:$0xff]
          %v292 = vmax.f32 %v291, 0.0
          %v293 = vadd.f32 %v279, %v289
          %v294 = vadd.f32 %v280, %v292
          %v295 = vmul.f32 %v289, %v292
          %v296 = vadd.f32 %v282, %v295
          %v297 = vmul.f32 %v289, %v289
          %v298 = vadd.f32 %v284, %v297
          %v299 = vmul.f32 %v292, %v292
          %v300 = vadd.f32 %v286, %v299
          %s301 = scalar_lea.vmem %s209, 16 [#allocation2]
          %v302 = vld [vmem:[%s301] sm:$0xff]
          %v303 = vmax.f32 %v302, 0.0
          %s304 = scalar_lea.vmem %s219, 16 [#allocation5]
          %v305 = vld [vmem:[%s304] sm:$0xff]
          %v306 = vmax.f32 %v305, 0.0
          %v307 = vadd.f32 %v293, %v303
          %v308 = vadd.f32 %v294, %v306
          %v309 = vmul.f32 %v303, %v306
          %v310 = vadd.f32 %v296, %v309
          %v311 = vmul.f32 %v303, %v303
          %v312 = vadd.f32 %v298, %v311
          %v313 = vmul.f32 %v306, %v306
          %v314 = vadd.f32 %v300, %v313
          %s315 = scalar_lea.vmem %s209, 24 [#allocation2]
          %v316 = vld [vmem:[%s315] sm:$0xff]
          %v317 = vmax.f32 %v316, 0.0
          %s318 = scalar_lea.vmem %s219, 24 [#allocation5]
          %v319 = vld [vmem:[%s318] sm:$0xff]
          %v320 = vmax.f32 %v319, 0.0
          %v321 = vadd.f32 %v307, %v317
          %v322 = vadd.f32 %v308, %v320
          %v323 = vmul.f32 %v317, %v320
          %v324 = vadd.f32 %v310, %v323
          %v325 = vmul.f32 %v317, %v317
          %v326 = vadd.f32 %v312, %v325
          %v327 = vmul.f32 %v320, %v320
          %v328 = vadd.f32 %v314, %v327
          %s329 = scalar_lea.vmem %s209, 32 [#allocation2]
          %v330 = vld [vmem:[%s329] sm:$0xff]
          %v331 = vmax.f32 %v330, 0.0
          %s332 = scalar_lea.vmem %s219, 32 [#allocation5]
          %v333 = vld [vmem:[%s332] sm:$0xff]
          %v334 = vmax.f32 %v333, 0.0
          %v335 = vadd.f32 %v321, %v331
          %v336 = vadd.f32 %v322, %v334
          %v337 = vmul.f32 %v331, %v334
          %v338 = vadd.f32 %v324, %v337
          %v339 = vmul.f32 %v331, %v331
          %v340 = vadd.f32 %v326, %v339
          %v341 = vmul.f32 %v334, %v334
          %v342 = vadd.f32 %v328, %v341
          %s343 = scalar_lea.vmem %s209, 40 [#allocation2]
          %v344 = vld [vmem:[%s343] sm:$0xff]
          %v345 = vmax.f32 %v344, 0.0
          %s346 = scalar_lea.vmem %s219, 40 [#allocation5]
          %v347 = vld [vmem:[%s346] sm:$0xff]
          %v348 = vmax.f32 %v347, 0.0
          %v349 = vadd.f32 %v335, %v345
          %v350 = vadd.f32 %v336, %v348
          %v351 = vmul.f32 %v345, %v348
          %v352 = vadd.f32 %v338, %v351
          %v353 = vmul.f32 %v345, %v345
          %v354 = vadd.f32 %v340, %v353
          %v355 = vmul.f32 %v348, %v348
          %v356 = vadd.f32 %v342, %v355
          %s357 = scalar_lea.vmem %s209, 48 [#allocation2]
          %v358 = vld [vmem:[%s357] sm:$0xff]
          %v359 = vmax.f32 %v358, 0.0
          %s360 = scalar_lea.vmem %s219, 48 [#allocation5]
          %v361 = vld [vmem:[%s360] sm:$0xff]
          %v362 = vmax.f32 %v361, 0.0
          %v363 = vadd.f32 %v349, %v359
          %v364 = vadd.f32 %v350, %v362
          %v365 = vmul.f32 %v359, %v362
          %v366 = vadd.f32 %v352, %v365
          %v367 = vmul.f32 %v359, %v359
          %v368 = vadd.f32 %v354, %v367
          %v369 = vmul.f32 %v362, %v362
          %v370 = vadd.f32 %v356, %v369
          %s371 = scalar_lea.vmem %s209, 56 [#allocation2]
          %v372 = vld [vmem:[%s371] sm:$0xff]
          %v373 = vmax.f32 %v372, 0.0
          %s374 = scalar_lea.vmem %s219, 56 [#allocation5]
          %v375 = vld [vmem:[%s374] sm:$0xff]
          %v376 = vmax.f32 %v375, 0.0
          %v377 = vadd.f32 %v363, %v373
          %v378 = vadd.f32 %v364, %v376
          %v379 = vmul.f32 %v373, %v376
          %v380 = vadd.f32 %v366, %v379
          %v381 = vmul.f32 %v373, %v373
          %v382 = vadd.f32 %v368, %v381
          %v383 = vmul.f32 %v376, %v376
          %v384 = vadd.f32 %v370, %v383
          %s385 = scalar_lea.vmem %s209, 64 [#allocation2]
          %v386 = vld [vmem:[%s385] sm:$0xff]
          %v387 = vmax.f32 %v386, 0.0
          %s388 = scalar_lea.vmem %s219, 64 [#allocation5]
          %v389 = vld [vmem:[%s388] sm:$0xff]
          %v390 = vmax.f32 %v389, 0.0
          %v391 = vadd.f32 %v377, %v387
          %v392 = vadd.f32 %v378, %v390
          %v393 = vmul.f32 %v387, %v390
          %v394 = vadd.f32 %v380, %v393
          %v395 = vmul.f32 %v387, %v387
          %v396 = vadd.f32 %v382, %v395
          %v397 = vmul.f32 %v390, %v390
          %v398 = vadd.f32 %v384, %v397
          %s399 = scalar_lea.vmem %s209, 72 [#allocation2]
          %v400 = vld [vmem:[%s399] sm:$0xff]
          %v401 = vmax.f32 %v400, 0.0
          %s402 = scalar_lea.vmem %s219, 72 [#allocation5]
          %v403 = vld [vmem:[%s402] sm:$0xff]
          %v404 = vmax.f32 %v403, 0.0
          %v405 = vadd.f32 %v391, %v401
          %v406 = vadd.f32 %v392, %v404
          %v407 = vmul.f32 %v401, %v404
          %v408 = vadd.f32 %v394, %v407
          %v409 = vmul.f32 %v401, %v401
          %v410 = vadd.f32 %v396, %v409
          %v411 = vmul.f32 %v404, %v404
          %v412 = vadd.f32 %v398, %v411
          %s413 = scalar_lea.vmem %s209, 80 [#allocation2]
          %v414 = vld [vmem:[%s413] sm:$0xff]
          %v415 = vmax.f32 %v414, 0.0
          %s416 = scalar_lea.vmem %s219, 80 [#allocation5]
          %v417 = vld [vmem:[%s416] sm:$0xff]
          %v418 = vmax.f32 %v417, 0.0
          %v419 = vadd.f32 %v405, %v415
          %v420 = vadd.f32 %v406, %v418
          %v421 = vmul.f32 %v415, %v418
          %v422 = vadd.f32 %v408, %v421
          %v423 = vmul.f32 %v415, %v415
          %v424 = vadd.f32 %v410, %v423
          %v425 = vmul.f32 %v418, %v418
          %v426 = vadd.f32 %v412, %v425
          %s427 = scalar_lea.vmem %s209, 88 [#allocation2]
          %v428 = vld [vmem:[%s427] sm:$0xff]
          %v429 = vmax.f32 %v428, 0.0
          %s430 = scalar_lea.vmem %s219, 88 [#allocation5]
          %v431 = vld [vmem:[%s430] sm:$0xff]
          %v432 = vmax.f32 %v431, 0.0
          %v433 = vadd.f32 %v419, %v429
          %v434 = vadd.f32 %v420, %v432
          %v435 = vmul.f32 %v429, %v432
          %v436 = vadd.f32 %v422, %v435
          %v437 = vmul.f32 %v429, %v429
          %v438 = vadd.f32 %v424, %v437
          %v439 = vmul.f32 %v432, %v432
          %v440 = vadd.f32 %v426, %v439
          %s441 = scalar_lea.vmem %s209, 96 [#allocation2]
          %v442 = vld [vmem:[%s441] sm:$0xff]
          %v443 = vmax.f32 %v442, 0.0
          %s444 = scalar_lea.vmem %s219, 96 [#allocation5]
          %v445 = vld [vmem:[%s444] sm:$0xff]
          %v446 = vmax.f32 %v445, 0.0
          %v447 = vadd.f32 %v433, %v443
          %v448 = vadd.f32 %v434, %v446
          %v449 = vmul.f32 %v443, %v446
          %v450 = vadd.f32 %v436, %v449
          %v451 = vmul.f32 %v443, %v443
          %v452 = vadd.f32 %v438, %v451
          %v453 = vmul.f32 %v446, %v446
          %v454 = vadd.f32 %v440, %v453
          %s455 = scalar_lea.vmem %s209, 104 [#allocation2]
          %v456 = vld [vmem:[%s455] sm:$0xff]
          %v457 = vmax.f32 %v456, 0.0
          %s458 = scalar_lea.vmem %s219, 104 [#allocation5]
          %v459 = vld [vmem:[%s458] sm:$0xff]
          %v460 = vmax.f32 %v459, 0.0
          %v461 = vadd.f32 %v447, %v457
          %v462 = vadd.f32 %v448, %v460
          %v463 = vmul.f32 %v457, %v460
          %v464 = vadd.f32 %v450, %v463
          %v465 = vmul.f32 %v457, %v457
          %v466 = vadd.f32 %v452, %v465
          %v467 = vmul.f32 %v460, %v460
          %v468 = vadd.f32 %v454, %v467
          %s469 = scalar_lea.vmem %s209, 112 [#allocation2]
          %v470 = vld [vmem:[%s469] sm:$0xff]
          %v471 = vmax.f32 %v470, 0.0
          %s472 = scalar_lea.vmem %s219, 112 [#allocation5]
          %v473 = vld [vmem:[%s472] sm:$0xff]
          %v474 = vmax.f32 %v473, 0.0
          %v475 = vadd.f32 %v461, %v471
          %v476 = vadd.f32 %v462, %v474
          %v477 = vmul.f32 %v471, %v474
          %v478 = vadd.f32 %v464, %v477
          %v479 = vmul.f32 %v471, %v471
          %v480 = vadd.f32 %v466, %v479
          %v481 = vmul.f32 %v474, %v474
          %v482 = vadd.f32 %v468, %v481
          %s483 = scalar_lea.vmem %s209, 120 [#allocation2]
          %v484 = vld [vmem:[%s483] sm:$0xff]
          %v485 = vmax.f32 %v484, 0.0
          %s486 = scalar_lea.vmem %s219, 120 [#allocation5]
          %v487 = vld [vmem:[%s486] sm:$0xff]
          %v488 = vmax.f32 %v487, 0.0
          %v489 = vadd.f32 %v475, %v485
          %v490 = vadd.f32 %v476, %v488
          %v491 = vmul.f32 %v485, %v488
          %v492 = vadd.f32 %v478, %v491
          %v493 = vmul.f32 %v485, %v485
          %v494 = vadd.f32 %v480, %v493
          %v495 = vmul.f32 %v488, %v488
          %v496 = vadd.f32 %v482, %v495
          %v497 = vld [vmem:[%s245] sm:$0xff]
          %v498 = vadd.f32 %v497, %v489
          %499 = vst [vmem:[%s245] sm:$0xff] %v498
          %s500 = scalar_lea.vmem %s245, 8 [#allocation7]
          %v501 = vld [vmem:[%s500] sm:$0xff]
          %v502 = vadd.f32 %v501, %v490
          %503 = vst [vmem:[%s500] sm:$0xff] %v502
          %s504 = scalar_lea.vmem %s245, 16 [#allocation7]
          %v505 = vld [vmem:[%s504] sm:$0xff]
          %v506 = vadd.f32 %v505, %v492
          %507 = vst [vmem:[%s504] sm:$0xff] %v506
          %s508 = scalar_lea.vmem %s245, 24 [#allocation7]
          %v509 = vld [vmem:[%s508] sm:$0xff]
          %v510 = vadd.f32 %v509, %v494
          %511 = vst [vmem:[%s508] sm:$0xff] %v510
          %s512 = scalar_lea.vmem %s245, 32 [#allocation7]
          %v513 = vld [vmem:[%s512] sm:$0xff]
          %v514 = vadd.f32 %v513, %v496
          %515 = vst [vmem:[%s512] sm:$0xff] %v514
        $region44: #{tpu_custom_call.1} parent=27 // pred_fallthru
          _
        %p516 = scmp.gt.s32.totalorder %s270, 16
        // Predicated region
        $region45: #{tpu_custom_call.1} parent=27 // pred_check
          %p517 = pneg %p516
        $region46: #{tpu_custom_call.1} parent=27 // pred_check_branch
          %519 = sbr.rel (%p517) target = $region48
        $region47: #{tpu_custom_call.1} parent=27 // pred_region
          %s520 = ssub.s32 16, %s269
          %v521 = vlaneseq
          %v522 = vshrl.u32 %v521, 7
          %v523 = vld [vmem:[%s209] sm:$0xff]
          %v524 = vmax.f32 %v523, 0.0
          %v525 = vld [vmem:[%s219] sm:$0xff]
          %v526 = vmax.f32 %v525, 0.0
          %v527 = vstv 0
          %v528 = vadd.s32 %v522, %v527
          %v529 = vstv %s520
          %vm530 = vcmp.lt.s32.totalorder %v528, %v529
          %v531 = vsel %vm530, %v524, 0.0
          %v532 = vsel %vm530, %v526, 0.0
          %v533 = vadd.f32 %v531, 0.0
          %v534 = vadd.f32 %v532, 0.0
          %v535 = vmul.f32 %v531, %v532
          %v536 = vadd.f32 %v535, 0.0
          %v537 = vmul.f32 %v531, %v531
          %v538 = vadd.f32 %v537, 0.0
          %v539 = vmul.f32 %v532, %v532
          %v540 = vadd.f32 %v539, 0.0
          %s541 = scalar_lea.vmem %s209, 8 [#allocation2]
          %v542 = vld [vmem:[%s541] sm:$0xff]
          %v543 = vmax.f32 %v542, 0.0
          %s544 = scalar_lea.vmem %s219, 8 [#allocation5]
          %v545 = vld [vmem:[%s544] sm:$0xff]
          %v546 = vmax.f32 %v545, 0.0
          %v547 = vstv 8
          %v548 = vadd.s32 %v522, %v547
          %vm549 = vcmp.lt.s32.totalorder %v548, %v529
          %v550 = vsel %vm549, %v543, 0.0
          %v551 = vsel %vm549, %v546, 0.0
          %v552 = vadd.f32 %v533, %v550
          %v553 = vadd.f32 %v534, %v551
          %v554 = vmul.f32 %v550, %v551
          %v555 = vadd.f32 %v536, %v554
          %v556 = vmul.f32 %v550, %v550
          %v557 = vadd.f32 %v538, %v556
          %v558 = vmul.f32 %v551, %v551
          %v559 = vadd.f32 %v540, %v558
          %s560 = scalar_lea.vmem %s209, 16 [#allocation2]
          %v561 = vld [vmem:[%s560] sm:$0xff]
          %v562 = vmax.f32 %v561, 0.0
          %s563 = scalar_lea.vmem %s219, 16 [#allocation5]
          %v564 = vld [vmem:[%s563] sm:$0xff]
          %v565 = vmax.f32 %v564, 0.0
          %v566 = vstv 16
          %v567 = vadd.s32 %v522, %v566
          %vm568 = vcmp.lt.s32.totalorder %v567, %v529
          %v569 = vsel %vm568, %v562, 0.0
          %v570 = vsel %vm568, %v565, 0.0
          %v571 = vadd.f32 %v552, %v569
          %v572 = vadd.f32 %v553, %v570
          %v573 = vmul.f32 %v569, %v570
          %v574 = vadd.f32 %v555, %v573
          %v575 = vmul.f32 %v569, %v569
          %v576 = vadd.f32 %v557, %v575
          %v577 = vmul.f32 %v570, %v570
          %v578 = vadd.f32 %v559, %v577
          %s579 = scalar_lea.vmem %s209, 24 [#allocation2]
          %v580 = vld [vmem:[%s579] sm:$0xff]
          %v581 = vmax.f32 %v580, 0.0
          %s582 = scalar_lea.vmem %s219, 24 [#allocation5]
          %v583 = vld [vmem:[%s582] sm:$0xff]
          %v584 = vmax.f32 %v583, 0.0
          %v585 = vstv 24
          %v586 = vadd.s32 %v522, %v585
          %vm587 = vcmp.lt.s32.totalorder %v586, %v529
          %v588 = vsel %vm587, %v581, 0.0
          %v589 = vsel %vm587, %v584, 0.0
          %v590 = vadd.f32 %v571, %v588
          %v591 = vadd.f32 %v572, %v589
          %v592 = vmul.f32 %v588, %v589
          %v593 = vadd.f32 %v574, %v592
          %v594 = vmul.f32 %v588, %v588
          %v595 = vadd.f32 %v576, %v594
          %v596 = vmul.f32 %v589, %v589
          %v597 = vadd.f32 %v578, %v596
          %s598 = scalar_lea.vmem %s209, 32 [#allocation2]
          %v599 = vld [vmem:[%s598] sm:$0xff]
          %v600 = vmax.f32 %v599, 0.0
          %s601 = scalar_lea.vmem %s219, 32 [#allocation5]
          %v602 = vld [vmem:[%s601] sm:$0xff]
          %v603 = vmax.f32 %v602, 0.0
          %v604 = vstv 32
          %v605 = vadd.s32 %v522, %v604
          %vm606 = vcmp.lt.s32.totalorder %v605, %v529
          %v607 = vsel %vm606, %v600, 0.0
          %v608 = vsel %vm606, %v603, 0.0
          %v609 = vadd.f32 %v590, %v607
          %v610 = vadd.f32 %v591, %v608
          %v611 = vmul.f32 %v607, %v608
          %v612 = vadd.f32 %v593, %v611
          %v613 = vmul.f32 %v607, %v607
          %v614 = vadd.f32 %v595, %v613
          %v615 = vmul.f32 %v608, %v608
          %v616 = vadd.f32 %v597, %v615
          %s617 = scalar_lea.vmem %s209, 40 [#allocation2]
          %v618 = vld [vmem:[%s617] sm:$0xff]
          %v619 = vmax.f32 %v618, 0.0
          %s620 = scalar_lea.vmem %s219, 40 [#allocation5]
          %v621 = vld [vmem:[%s620] sm:$0xff]
          %v622 = vmax.f32 %v621, 0.0
          %v623 = vstv 40
          %v624 = vadd.s32 %v522, %v623
          %vm625 = vcmp.lt.s32.totalorder %v624, %v529
          %v626 = vsel %vm625, %v619, 0.0
          %v627 = vsel %vm625, %v622, 0.0
          %v628 = vadd.f32 %v609, %v626
          %v629 = vadd.f32 %v610, %v627
          %v630 = vmul.f32 %v626, %v627
          %v631 = vadd.f32 %v612, %v630
          %v632 = vmul.f32 %v626, %v626
          %v633 = vadd.f32 %v614, %v632
          %v634 = vmul.f32 %v627, %v627
          %v635 = vadd.f32 %v616, %v634
          %s636 = scalar_lea.vmem %s209, 48 [#allocation2]
          %v637 = vld [vmem:[%s636] sm:$0xff]
          %v638 = vmax.f32 %v637, 0.0
          %s639 = scalar_lea.vmem %s219, 48 [#allocation5]
          %v640 = vld [vmem:[%s639] sm:$0xff]
          %v641 = vmax.f32 %v640, 0.0
          %v642 = vstv 48
          %v643 = vadd.s32 %v522, %v642
          %vm644 = vcmp.lt.s32.totalorder %v643, %v529
          %v645 = vsel %vm644, %v638, 0.0
          %v646 = vsel %vm644, %v641, 0.0
          %v647 = vadd.f32 %v628, %v645
          %v648 = vadd.f32 %v629, %v646
          %v649 = vmul.f32 %v645, %v646
          %v650 = vadd.f32 %v631, %v649
          %v651 = vmul.f32 %v645, %v645
          %v652 = vadd.f32 %v633, %v651
          %v653 = vmul.f32 %v646, %v646
          %v654 = vadd.f32 %v635, %v653
          %s655 = scalar_lea.vmem %s209, 56 [#allocation2]
          %v656 = vld [vmem:[%s655] sm:$0xff]
          %v657 = vmax.f32 %v656, 0.0
          %s658 = scalar_lea.vmem %s219, 56 [#allocation5]
          %v659 = vld [vmem:[%s658] sm:$0xff]
          %v660 = vmax.f32 %v659, 0.0
          %v661 = vstv 56
          %v662 = vadd.s32 %v522, %v661
          %vm663 = vcmp.lt.s32.totalorder %v662, %v529
          %v664 = vsel %vm663, %v657, 0.0
          %v665 = vsel %vm663, %v660, 0.0
          %v666 = vadd.f32 %v647, %v664
          %v667 = vadd.f32 %v648, %v665
          %v668 = vmul.f32 %v664, %v665
          %v669 = vadd.f32 %v650, %v668
          %v670 = vmul.f32 %v664, %v664
          %v671 = vadd.f32 %v652, %v670
          %v672 = vmul.f32 %v665, %v665
          %v673 = vadd.f32 %v654, %v672
          %s674 = scalar_lea.vmem %s209, 64 [#allocation2]
          %v675 = vld [vmem:[%s674] sm:$0xff]
          %v676 = vmax.f32 %v675, 0.0
          %s677 = scalar_lea.vmem %s219, 64 [#allocation5]
          %v678 = vld [vmem:[%s677] sm:$0xff]
          %v679 = vmax.f32 %v678, 0.0
          %v680 = vstv 64
          %v681 = vadd.s32 %v522, %v680
          %vm682 = vcmp.lt.s32.totalorder %v681, %v529
          %v683 = vsel %vm682, %v676, 0.0
          %v684 = vsel %vm682, %v679, 0.0
          %v685 = vadd.f32 %v666, %v683
          %v686 = vadd.f32 %v667, %v684
          %v687 = vmul.f32 %v683, %v684
          %v688 = vadd.f32 %v669, %v687
          %v689 = vmul.f32 %v683, %v683
          %v690 = vadd.f32 %v671, %v689
          %v691 = vmul.f32 %v684, %v684
          %v692 = vadd.f32 %v673, %v691
          %s693 = scalar_lea.vmem %s209, 72 [#allocation2]
          %v694 = vld [vmem:[%s693] sm:$0xff]
          %v695 = vmax.f32 %v694, 0.0
          %s696 = scalar_lea.vmem %s219, 72 [#allocation5]
          %v697 = vld [vmem:[%s696] sm:$0xff]
          %v698 = vmax.f32 %v697, 0.0
          %v699 = vstv 72
          %v700 = vadd.s32 %v522, %v699
          %vm701 = vcmp.lt.s32.totalorder %v700, %v529
          %v702 = vsel %vm701, %v695, 0.0
          %v703 = vsel %vm701, %v698, 0.0
          %v704 = vadd.f32 %v685, %v702
          %v705 = vadd.f32 %v686, %v703
          %v706 = vmul.f32 %v702, %v703
          %v707 = vadd.f32 %v688, %v706
          %v708 = vmul.f32 %v702, %v702
          %v709 = vadd.f32 %v690, %v708
          %v710 = vmul.f32 %v703, %v703
          %v711 = vadd.f32 %v692, %v710
          %s712 = scalar_lea.vmem %s209, 80 [#allocation2]
          %v713 = vld [vmem:[%s712] sm:$0xff]
          %v714 = vmax.f32 %v713, 0.0
          %s715 = scalar_lea.vmem %s219, 80 [#allocation5]
          %v716 = vld [vmem:[%s715] sm:$0xff]
          %v717 = vmax.f32 %v716, 0.0
          %v718 = vstv 80
          %v719 = vadd.s32 %v522, %v718
          %vm720 = vcmp.lt.s32.totalorder %v719, %v529
          %v721 = vsel %vm720, %v714, 0.0
          %v722 = vsel %vm720, %v717, 0.0
          %v723 = vadd.f32 %v704, %v721
          %v724 = vadd.f32 %v705, %v722
          %v725 = vmul.f32 %v721, %v722
          %v726 = vadd.f32 %v707, %v725
          %v727 = vmul.f32 %v721, %v721
          %v728 = vadd.f32 %v709, %v727
          %v729 = vmul.f32 %v722, %v722
          %v730 = vadd.f32 %v711, %v729
          %s731 = scalar_lea.vmem %s209, 88 [#allocation2]
          %v732 = vld [vmem:[%s731] sm:$0xff]
          %v733 = vmax.f32 %v732, 0.0
          %s734 = scalar_lea.vmem %s219, 88 [#allocation5]
          %v735 = vld [vmem:[%s734] sm:$0xff]
          %v736 = vmax.f32 %v735, 0.0
          %v737 = vstv 88
          %v738 = vadd.s32 %v522, %v737
          %vm739 = vcmp.lt.s32.totalorder %v738, %v529
          %v740 = vsel %vm739, %v733, 0.0
          %v741 = vsel %vm739, %v736, 0.0
          %v742 = vadd.f32 %v723, %v740
          %v743 = vadd.f32 %v724, %v741
          %v744 = vmul.f32 %v740, %v741
          %v745 = vadd.f32 %v726, %v744
          %v746 = vmul.f32 %v740, %v740
          %v747 = vadd.f32 %v728, %v746
          %v748 = vmul.f32 %v741, %v741
          %v749 = vadd.f32 %v730, %v748
          %s750 = scalar_lea.vmem %s209, 96 [#allocation2]
          %v751 = vld [vmem:[%s750] sm:$0xff]
          %v752 = vmax.f32 %v751, 0.0
          %s753 = scalar_lea.vmem %s219, 96 [#allocation5]
          %v754 = vld [vmem:[%s753] sm:$0xff]
          %v755 = vmax.f32 %v754, 0.0
          %v756 = vstv 96
          %v757 = vadd.s32 %v522, %v756
          %vm758 = vcmp.lt.s32.totalorder %v757, %v529
          %v759 = vsel %vm758, %v752, 0.0
          %v760 = vsel %vm758, %v755, 0.0
          %v761 = vadd.f32 %v742, %v759
          %v762 = vadd.f32 %v743, %v760
          %v763 = vmul.f32 %v759, %v760
          %v764 = vadd.f32 %v745, %v763
          %v765 = vmul.f32 %v759, %v759
          %v766 = vadd.f32 %v747, %v765
          %v767 = vmul.f32 %v760, %v760
          %v768 = vadd.f32 %v749, %v767
          %s769 = scalar_lea.vmem %s209, 104 [#allocation2]
          %v770 = vld [vmem:[%s769] sm:$0xff]
          %v771 = vmax.f32 %v770, 0.0
          %s772 = scalar_lea.vmem %s219, 104 [#allocation5]
          %v773 = vld [vmem:[%s772] sm:$0xff]
          %v774 = vmax.f32 %v773, 0.0
          %v775 = vstv 104
          %v776 = vadd.s32 %v522, %v775
          %vm777 = vcmp.lt.s32.totalorder %v776, %v529
          %v778 = vsel %vm777, %v771, 0.0
          %v779 = vsel %vm777, %v774, 0.0
          %v780 = vadd.f32 %v761, %v778
          %v781 = vadd.f32 %v762, %v779
          %v782 = vmul.f32 %v778, %v779
          %v783 = vadd.f32 %v764, %v782
          %v784 = vmul.f32 %v778, %v778
          %v785 = vadd.f32 %v766, %v784
          %v786 = vmul.f32 %v779, %v779
          %v787 = vadd.f32 %v768, %v786
          %s788 = scalar_lea.vmem %s209, 112 [#allocation2]
          %v789 = vld [vmem:[%s788] sm:$0xff]
          %v790 = vmax.f32 %v789, 0.0
          %s791 = scalar_lea.vmem %s219, 112 [#allocation5]
          %v792 = vld [vmem:[%s791] sm:$0xff]
          %v793 = vmax.f32 %v792, 0.0
          %v794 = vstv 112
          %v795 = vadd.s32 %v522, %v794
          %vm796 = vcmp.lt.s32.totalorder %v795, %v529
          %v797 = vsel %vm796, %v790, 0.0
          %v798 = vsel %vm796, %v793, 0.0
          %v799 = vadd.f32 %v780, %v797
          %v800 = vadd.f32 %v781, %v798
          %v801 = vmul.f32 %v797, %v798
          %v802 = vadd.f32 %v783, %v801
          %v803 = vmul.f32 %v797, %v797
          %v804 = vadd.f32 %v785, %v803
          %v805 = vmul.f32 %v798, %v798
          %v806 = vadd.f32 %v787, %v805
          %s807 = scalar_lea.vmem %s209, 120 [#allocation2]
          %v808 = vld [vmem:[%s807] sm:$0xff]
          %v809 = vmax.f32 %v808, 0.0
          %s810 = scalar_lea.vmem %s219, 120 [#allocation5]
          %v811 = vld [vmem:[%s810] sm:$0xff]
          %v812 = vmax.f32 %v811, 0.0
          %v813 = vstv 120
          %v814 = vadd.s32 %v522, %v813
          %vm815 = vcmp.lt.s32.totalorder %v814, %v529
          %v816 = vsel %vm815, %v809, 0.0
          %v817 = vsel %vm815, %v812, 0.0
          %v818 = vadd.f32 %v799, %v816
          %v819 = vadd.f32 %v800, %v817
          %v820 = vmul.f32 %v816, %v817
          %v821 = vadd.f32 %v802, %v820
          %v822 = vmul.f32 %v816, %v816
          %v823 = vadd.f32 %v804, %v822
          %v824 = vmul.f32 %v817, %v817
          %v825 = vadd.f32 %v806, %v824
          %v826 = vld [vmem:[%s245] sm:$0xff]
          %v827 = vadd.f32 %v826, %v818
          %828 = vst [vmem:[%s245] sm:$0xff] %v827
          %s829 = scalar_lea.vmem %s245, 8 [#allocation7]
          %v830 = vld [vmem:[%s829] sm:$0xff]
          %v831 = vadd.f32 %v830, %v819
          %832 = vst [vmem:[%s829] sm:$0xff] %v831
          %s833 = scalar_lea.vmem %s245, 16 [#allocation7]
          %v834 = vld [vmem:[%s833] sm:$0xff]
          %v835 = vadd.f32 %v834, %v821
          %836 = vst [vmem:[%s833] sm:$0xff] %v835
          %s837 = scalar_lea.vmem %s245, 24 [#allocation7]
          %v838 = vld [vmem:[%s837] sm:$0xff]
          %v839 = vadd.f32 %v838, %v823
          %840 = vst [vmem:[%s837] sm:$0xff] %v839
          %s841 = scalar_lea.vmem %s245, 32 [#allocation7]
          %v842 = vld [vmem:[%s841] sm:$0xff]
          %v843 = vadd.f32 %v842, %v825
          %844 = vst [vmem:[%s841] sm:$0xff] %v843
        $region48: #{tpu_custom_call.1} parent=27 // pred_fallthru
          _
        %s845 = sand.u32 %s106, 1
        %s846 = scalar_lea.sflag [#allocation4], %s845
        %s847 = sand.u32 %s106, 1
        %s848 = smul.addr %s847, 40
        %s849 = scalar_lea.vmem [#allocation7], %s848
        // Predicated region
        $region49: #{tpu_custom_call.1} parent=27 // pred_check
          %p850 = pneg %p116
        $region50: #{tpu_custom_call.1} parent=27 // pred_check_branch
          %852 = sbr.rel (%p850) target = $region52
        $region51: #{tpu_custom_call.1} parent=27 // pred_region
          %s853 = smul.u32 5, %s26
          %855 = vsyncadd %s846, 0
          %s856 = smul.addr %s853, 8
          %s857 = scalar_lea.hbm %s2, %s856
          %s858 = sshll.u32 %s849, 4
          %s859 = int_to_ptr.vmem [resolvable:$true] %s858
          %s860 = sshll.u32 %s857, 4
          %s861 = int_to_ptr.hbm [resolvable:$true] %s860
          %866 = dma.vmem_to_hbm [thread:$0]  %s859, 640, %s861, %s846, 128, 128, 8
        $region52: #{tpu_custom_call.1} parent=27 // pred_fallthru
          _
      $region28: #{tpu_custom_call.1} parent=5 // pred_fallthru
        _
      %p867 = scmp.le.s32.totalorder 2, %s17
      // Predicated region
      $region53: #{tpu_custom_call.1} parent=5 // pred_check
        %p868 = pneg %p867
      $region54: #{tpu_custom_call.1} parent=5 // pred_check_branch
        %870 = sbr.rel (%p868) target = $region56
      $region55: #{tpu_custom_call.1} parent=5 // pred_region
        %s871 = ssub.s32 %s17, 2
        // Predicated region
        $region57: #{tpu_custom_call.1} parent=55 // pred_check
          %p872 = pneg %p122
        $region58: #{tpu_custom_call.1} parent=55 // pred_check_branch
          %874 = sbr.rel (%p872) target = $region60
        $region59: #{tpu_custom_call.1} parent=55 // pred_region
          %s875 = sand.u32 %s107, 1
          %s876 = scalar_lea.sflag [#allocation4], %s875
          %s877 = sand.u32 %s107, 1
          %s878 = smul.addr %s877, 40
          %s879 = scalar_lea.vmem [#allocation7], %s878
          %881 = dma.done %s876, 640
        $region60: #{tpu_custom_call.1} parent=55 // pred_fallthru
          _
      $region56: #{tpu_custom_call.1} parent=5 // pred_fallthru
        _
    $region6: #{tpu_custom_call.1} parent=1 // loop_footer
      %s21 = sadd.s32 1, %s17
    $region7: #{tpu_custom_call.1} parent=1 // loop_footer_branch
      %16 = sbr.rel target = $region3
    $region8: #{tpu_custom_call.1} parent=1 // loop_exit
      _
    %882 = vsyncpa [#allocation3], 1
    %s883 = scalar_lea.sflag [#allocation3], 1
    %884 = vsyncpa %s883, 1
    %885 = vsyncpa [#allocation6], 1
    %s886 = scalar_lea.sflag [#allocation6], 1
    %887 = vsyncpa %s886, 1
    %888 = vsyncpa [#allocation4], 1
    %s889 = scalar_lea.sflag [#allocation4], 1
    %890 = vsyncpa %s889, 1

</llo_original>
